<compile_context>
chip_gen: v7x
topology: tpu7x:2x2x1
jax: 0.10.0
libtpu: 0.0.40
codegen_flags: <defaults>
</compile_context>

<pallas_src>
import functools

import jax
import jax.numpy as jnp
from jax import lax
from jax.experimental import pallas as pl
from jax.experimental.pallas import tpu as pltpu


def mha_attn_kernel(q_ref, k_ref, v_ref, wo_ref, bo_ref, o_ref, acc_ref, *, num_heads):
    """Grid step (b, t): fused softmax-attention + out-projection for one query tile.

    q_ref:  (H, tq,  Dh)  projected+scaled queries (head-major), activation dtype
    k_ref:  (H, Skv, Dh)  projected keys (head-major), activation dtype
    v_ref:  (H, Skv, Dh)  projected values (head-major), activation dtype
    wo_ref: (H, Dh,  E)   out-projection weight, head-major, activation dtype
    bo_ref: (1, E)        out-projection bias, f32
    o_ref:  (tq, E)       output tile
    acc_ref:(tq, E) f32   out-projection accumulator scratch
    """
    in_dtype = q_ref.dtype
    use_bf16_eup = in_dtype == jnp.bfloat16   # bf16 EUP exists on v6e/v7x (v5e upcasts)

    acc_ref[...] = jnp.zeros_like(acc_ref)

    @pl.loop(0, num_heads)
    def _head(h):
        qh = q_ref[h]                                     # (tq, Dh)
        kh = k_ref[h]                                     # (Skv, Dh)
        vh = v_ref[h]                                     # (Skv, Dh)

        # Q.K^T contracting the last dims directly (no in-kernel transpose of K).
        scores = lax.dot_general(
            qh, kh, (((1,), (1,)), ((), ())),
            preferred_element_type=jnp.float32)           # (tq, Skv) f32

        m = jnp.max(scores, axis=-1, keepdims=True)
        s = scores - m
        if use_bf16_eup:
            p = jnp.exp(s.astype(jnp.bfloat16))           # bf16 exp on the EUP
        else:
            p = jnp.exp(s)                                # f32 exp
        l = jnp.sum(p, axis=-1, keepdims=True, dtype=jnp.float32)   # (tq, 1) f32

        oh = jnp.dot(p.astype(in_dtype), vh,
                     preferred_element_type=jnp.float32)  # (tq, Dh) f32

        # Deferred softmax normalization on the small (tq, Dh) output.
        inv_l = pl.reciprocal(l, approx=use_bf16_eup)
        oh = (oh * inv_l).astype(in_dtype)

        # Per-head out-projection contraction accumulated into the f32 scratch:
        # sum_h oh @ wo[h]  ==  concat_h(oh) @ wo_t.
        acc_ref[...] += jnp.dot(oh, wo_ref[h],
                                preferred_element_type=jnp.float32)

    o_ref[...] = (acc_ref[...] + bo_ref[...]).astype(o_ref.dtype)


def _choose_q_tile(seq_len, max_tile=256):
    """Full sequence if it fits one tile, otherwise a 256-aligned tile (query axis padded)."""
    return seq_len if seq_len <= max_tile else max_tile


def _vmem_limit_bytes(H, q_tile, Skv, Dh, E, itemsize):
    est = 0
    est += 2 * H * q_tile * Dh * itemsize          # q block (double-buffered)
    est += 2 * 2 * H * Skv * Dh * itemsize         # k + v blocks (double-buffered)
    est += 2 * H * Dh * E * itemsize               # wo (double-buffered)
    est += 2 * E * 4                               # bo
    est += 2 * q_tile * E * itemsize               # output block (double-buffered)
    est += q_tile * E * 4                          # acc scratch
    est += 3 * q_tile * Skv * 4                    # scores / p / temporaries (one head)
    limit = int(est * 1.5) + (4 << 20)
    return max(32 << 20, min(64 << 20, limit))     # 64 MiB cap is safe on v7x too


def multihead_attention(query, key, value, in_proj_weight, in_proj_bias,
                        out_proj_weight, out_proj_bias, num_heads, *, q_tile=None):
    B, Sq, E = query.shape
    Bk, Skv, Ek = key.shape
    assert key.shape == value.shape and Bk == B and Ek == E
    assert E % num_heads == 0
    H = num_heads
    Dh = E // H
    scaling = float(Dh) ** (-0.5)
    in_dtype = query.dtype

    # ---- Host-side parameter prep (done once by XLA, cast to activation dtype). ----
    wq_t = (in_proj_weight[0:E, :] * scaling).T.astype(in_dtype)      # (E, E), scaled
    wk_t = in_proj_weight[E:2 * E, :].T.astype(in_dtype)              # (E, E)
    wv_t = in_proj_weight[2 * E:3 * E, :].T.astype(in_dtype)          # (E, E)
    bq = (in_proj_bias[0:E] * scaling).astype(in_dtype)
    bk = in_proj_bias[E:2 * E].astype(in_dtype)
    bv = in_proj_bias[2 * E:3 * E].astype(in_dtype)

    # ---- Hoisted in-projections (peak-MXU XLA GEMMs), head-major (B, H, S, Dh). ----
    qp = (query @ wq_t + bq).reshape(B, Sq, H, Dh).transpose(0, 2, 1, 3).astype(in_dtype)
    kp = (key @ wk_t + bk).reshape(B, Skv, H, Dh).transpose(0, 2, 1, 3).astype(in_dtype)
    vp = (value @ wv_t + bv).reshape(B, Skv, H, Dh).transpose(0, 2, 1, 3).astype(in_dtype)

    # Out-projection weight, head-major: wo_hm[h] == out_proj_weight.T[h*Dh:(h+1)*Dh, :].
    wo_hm = out_proj_weight.T.reshape(H, Dh, E).astype(in_dtype)
    bo = out_proj_bias.reshape(1, E).astype(jnp.float32)

    # ---- Query-axis tiling (pad up to a multiple of q_tile, drop the pad at the end). ----
    if q_tile is None:
        q_tile = _choose_q_tile(Sq)
    Sq_pad = ((Sq + q_tile - 1) // q_tile) * q_tile
    if Sq_pad != Sq:
        qp = jnp.pad(qp, ((0, 0), (0, 0), (0, Sq_pad - Sq), (0, 0)))
    num_q_tiles = Sq_pad // q_tile

    kernel = functools.partial(mha_attn_kernel, num_heads=H)
    vmem_limit = _vmem_limit_bytes(H, q_tile, Skv, Dh, E, jnp.dtype(in_dtype).itemsize)

    out = pl.pallas_call(
        kernel,
        out_shape=jax.ShapeDtypeStruct((B, Sq_pad, E), query.dtype),
        grid_spec=pltpu.PrefetchScalarGridSpec(
            num_scalar_prefetch=0,
            grid=(B, num_q_tiles),
            in_specs=[
                pl.BlockSpec((None, H, q_tile, Dh), lambda b, t: (b, 0, t, 0)),  # Q (head-major)
                pl.BlockSpec((None, H, Skv, Dh), lambda b, t: (b, 0, 0, 0)),     # K (head-major)
                pl.BlockSpec((None, H, Skv, Dh), lambda b, t: (b, 0, 0, 0)),     # V (head-major)
                pl.BlockSpec((H, Dh, E), lambda b, t: (0, 0, 0)),                # wo (head-major)
                pl.BlockSpec((1, E), lambda b, t: (0, 0)),                       # bo (f32)
            ],
            out_specs=pl.BlockSpec((None, q_tile, E), lambda b, t: (b, t, 0)),
            scratch_shapes=[
                pltpu.VMEM((q_tile, E), jnp.float32),   # out-projection accumulator
            ],
        ),
        compiler_params=pltpu.CompilerParams(
            # Every (b, t) step is independent now (K/V projection hoisted), so both
            # grid axes can shard across TensorCores (matters on v7x's 2 TCs).
            dimension_semantics=("parallel", "parallel"),
            vmem_limit_bytes=vmem_limit,
        ),
    )(qp, kp, vp, wo_hm, bo)

    if Sq_pad != Sq:
        out = out[:, :Sq, :]
    return out


def mha_reference(query, key, value, in_proj_weight, in_proj_bias,
                  out_proj_weight, out_proj_bias, num_heads):
    """Pure-JAX reference mirroring multi_head_attention_forward."""
    B, S, E = query.shape
    head_dim = E // num_heads
    scaling = float(head_dim) ** (-0.5)

    wq, wk, wv = (in_proj_weight[0:E], in_proj_weight[E:2 * E], in_proj_weight[2 * E:])
    bq, bk, bv = (in_proj_bias[0:E], in_proj_bias[E:2 * E], in_proj_bias[2 * E:])

    q = query @ wq.T + bq
    k = key @ wk.T + bk
    v = value @ wv.T + bv
    q = q * scaling

    q = q.reshape(B, S, num_heads, head_dim).transpose(0, 2, 1, 3)
    k = k.reshape(B, S, num_heads, head_dim).transpose(0, 2, 1, 3)
    v = v.reshape(B, S, num_heads, head_dim).transpose(0, 2, 1, 3)

    w = jnp.einsum("bhqd,bhkd->bhqk", q, k)
    w = jax.nn.softmax(w, axis=-1)
    o = jnp.einsum("bhqk,bhkd->bhqd", w, v)
    o = o.transpose(0, 2, 1, 3).reshape(B, S, E)
    return o @ out_proj_weight.T + out_proj_bias


if __name__ == "__main__":
    # Keep the f32 correctness check tight (full-precision f32 matmuls in both the
    # XLA reference and the kernel). Production bf16 inputs are unaffected.
    jax.config.update("jax_default_matmul_precision", "float32")

    B, S, E, H = 2, 8, 32, 4

    key0 = jax.random.PRNGKey(0)
    k_q, k_k, k_v, k_wi, k_wo = jax.random.split(key0, 5)

    query = jax.random.normal(k_q, (B, S, E), dtype=jnp.float32)
    key_ = jax.random.normal(k_k, (B, S, E), dtype=jnp.float32)
    value = jax.random.normal(k_v, (B, S, E), dtype=jnp.float32)

    # Parameters (deterministic, matching the module's __init__ shapes):
    # in_proj_weight: (3E, E) xavier_uniform; in_proj_bias: zeros
    lim_in = (6.0 / (3 * E + E)) ** 0.5
    in_proj_weight = jax.random.uniform(k_wi, (3 * E, E), jnp.float32, -lim_in, lim_in)
    in_proj_bias = jnp.zeros((3 * E,), jnp.float32)
    # out_proj: Linear(E, E) weight (E, E), bias zeros (constant_ 0.0 in _reset_parameters)
    lim_out = (6.0 / (E + E)) ** 0.5
    out_proj_weight = jax.random.uniform(k_wo, (E, E), jnp.float32, -lim_out, lim_out)
    out_proj_bias = jnp.zeros((E,), jnp.float32)

    out = multihead_attention(query, key_, value, in_proj_weight, in_proj_bias,
                              out_proj_weight, out_proj_bias, H)
    out = jax.block_until_ready(out)

    ref = mha_reference(query, key_, value, in_proj_weight, in_proj_bias,
                        out_proj_weight, out_proj_bias, H)
    assert out.shape == (B, S, E)
    # Tolerance documents the host-side scaling fold, head-major regrouping and the
    # deferred softmax normalization (mathematically identical; tiny reassociation diffs).
    assert jnp.allclose(out, ref, atol=2e-3, rtol=2e-3), "mismatch vs JAX reference"

    print("KERNEL_OK")
</pallas_src>

<mosaic_0001>
module attributes {stable_mosaic.version = 11 : i64} {
  func.func @mha_attn_kernel(%arg0: i32, %arg1: i32, %arg2: memref<1x4x8x8xf32, #tpu.memory_space<vmem>>, %arg3: memref<1x4x8x8xf32, #tpu.memory_space<vmem>>, %arg4: memref<1x4x8x8xf32, #tpu.memory_space<vmem>>, %arg5: memref<4x8x32xf32, #tpu.memory_space<vmem>>, %arg6: memref<1x32xf32, #tpu.memory_space<vmem>>, %arg7: memref<1x8x32xf32, #tpu.memory_space<vmem>>, %arg8: memref<8x32xf32, #tpu.memory_space<vmem>>) attributes {dimension_semantics = [#tpu.dimension_semantics<parallel>, #tpu.dimension_semantics<parallel>], iteration_bounds = array<i64: 2, 1>, scalar_prefetch = 0 : i64, scratch_operands = 1 : i64, tpu.core_type = #tpu.core_type<tc>, window_params = [{transform_indices = @transform_0, window_bounds = array<i64: 1, 4, 8, 8>}, {transform_indices = @transform_1, window_bounds = array<i64: 1, 4, 8, 8>}, {transform_indices = @transform_2, window_bounds = array<i64: 1, 4, 8, 8>}, {pipeline_mode = #tpu.pipeline_mode<synchronous>, transform_indices = @transform_3, window_bounds = array<i64: 4, 8, 32>}, {pipeline_mode = #tpu.pipeline_mode<synchronous>, transform_indices = @transform_4, window_bounds = array<i64: 1, 32>}, {transform_indices = @transform_5, window_bounds = array<i64: 1, 8, 32>}]} {
    %cst = arith.constant 0.000000e+00 : f32
    %0 = vector.broadcast %cst : f32 to vector<8x32xf32>
    %c0 = arith.constant 0 : index
    %c0_0 = arith.constant 0 : index
    %1 = vector.load %arg8[%c0, %c0_0] : memref<8x32xf32, #tpu.memory_space<vmem>>, vector<8x32xf32>
    tpu.vector_store %arg8[%c0, %c0_0], %0 {strides = array<i32>} : memref<8x32xf32, #tpu.memory_space<vmem>>, vector<8x32xf32>,
    %c0_i32 = arith.constant 0 : i32
    %c4_i32 = arith.constant 4 : i32
    %2 = arith.addi %c0_i32, %c4_i32 : i32
    %c1_i32 = arith.constant 1 : i32
    scf.for %arg9 = %c0_i32 to %2 step %c1_i32  : i32 {
      %c1_i32_9 = arith.constant 1 : i32
      %10 = arith.muli %arg9, %c1_i32_9 : i32
      %c0_i32_10 = arith.constant 0 : i32
      %11 = arith.addi %c0_i32_10, %10 : i32
      %c0_11 = arith.constant 0 : index
      %12 = arith.index_cast %11 : i32 to index
      %c0_12 = arith.constant 0 : index
      %c0_13 = arith.constant 0 : index
      %13 = vector.load %arg2[%c0_11, %12, %c0_12, %c0_13] : memref<1x4x8x8xf32, #tpu.memory_space<vmem>>, vector<1x1x8x8xf32>
      %14 = vector.shape_cast %13 : vector<1x1x8x8xf32> to vector<8x8xf32>
      %c0_14 = arith.constant 0 : index
      %15 = arith.index_cast %11 : i32 to index
      %c0_15 = arith.constant 0 : index
      %c0_16 = arith.constant 0 : index
      %16 = vector.load %arg3[%c0_14, %15, %c0_15, %c0_16] : memref<1x4x8x8xf32, #tpu.memory_space<vmem>>, vector<1x1x8x8xf32>
      %17 = vector.shape_cast %16 : vector<1x1x8x8xf32> to vector<8x8xf32>
      %c0_17 = arith.constant 0 : index
      %18 = arith.index_cast %11 : i32 to index
      %c0_18 = arith.constant 0 : index
      %c0_19 = arith.constant 0 : index
      %19 = vector.load %arg4[%c0_17, %18, %c0_18, %c0_19] : memref<1x4x8x8xf32, #tpu.memory_space<vmem>>, vector<1x1x8x8xf32>
      %20 = vector.shape_cast %19 : vector<1x1x8x8xf32> to vector<8x8xf32>
      %cst_20 = arith.constant dense<0.000000e+00> : vector<8x8xf32>
      %21 = tpu.matmul %14, %17, %cst_20 {dimension_numbers = #tpu.dot_dimension_numbers<[1], [1], [0], [0], [0, 0, 1, 0], [], []>, precision = #tpu.contract_precision<fp32>} : vector<8x8xf32>, vector<8x8xf32>, vector<8x8xf32> -> vector<8x8xf32>
      %cst_21 = arith.constant dense<0xFF800000> : vector<8xf32>
      %22 = vector.multi_reduction <maximumf>, %21, %cst_21 [1] : vector<8x8xf32> to vector<8xf32>
      %23 = vector.shape_cast %22 : vector<8xf32> to vector<8x1xf32>
      %24 = vector.broadcast %23 : vector<8x1xf32> to vector<8x8xf32>
      %25 = arith.subf %21, %24 : vector<8x8xf32>
      %26 = math.exp %25 : vector<8x8xf32>
      %cst_22 = arith.constant dense<0.000000e+00> : vector<8xf32>
      %27 = vector.multi_reduction <add>, %26, %cst_22 [1] : vector<8x8xf32> to vector<8xf32>
      %28 = vector.shape_cast %27 : vector<8xf32> to vector<8x1xf32>
      %cst_23 = arith.constant dense<0.000000e+00> : vector<8x8xf32>
      %29 = tpu.matmul %26, %20, %cst_23 {dimension_numbers = #tpu.dot_dimension_numbers<[1], [0], [0], [1], [0, 0, 1, 1], [], []>, precision = #tpu.contract_precision<fp32>} : vector<8x8xf32>, vector<8x8xf32>, vector<8x8xf32> -> vector<8x8xf32>
      %30 = tpu.reciprocal %28 : vector<8x1xf32> -> vector<8x1xf32>
      %31 = vector.broadcast %30 : vector<8x1xf32> to vector<8x8xf32>
      %32 = arith.mulf %29, %31 : vector<8x8xf32>
      %c0_24 = arith.constant 0 : index
      %c0_25 = arith.constant 0 : index
      %33 = vector.load %arg8[%c0_24, %c0_25] : memref<8x32xf32, #tpu.memory_space<vmem>>, vector<8x32xf32>
      %34 = arith.index_cast %11 : i32 to index
      %c0_26 = arith.constant 0 : index
      %c0_27 = arith.constant 0 : index
      %35 = vector.load %arg5[%34, %c0_26, %c0_27] : memref<4x8x32xf32, #tpu.memory_space<vmem>>, vector<1x8x32xf32>
      %36 = vector.shape_cast %35 : vector<1x8x32xf32> to vector<8x32xf32>
      %cst_28 = arith.constant dense<0.000000e+00> : vector<8x32xf32>
      %37 = tpu.matmul %32, %36, %cst_28 {dimension_numbers = #tpu.dot_dimension_numbers<[1], [0], [0], [1], [0, 0, 1, 1], [], []>, precision = #tpu.contract_precision<fp32>} : vector<8x8xf32>, vector<8x32xf32>, vector<8x32xf32> -> vector<8x32xf32>
      %38 = arith.addf %33, %37 : vector<8x32xf32>
      %c0_29 = arith.constant 0 : index
      %c0_30 = arith.constant 0 : index
      %39 = vector.load %arg8[%c0_29, %c0_30] : memref<8x32xf32, #tpu.memory_space<vmem>>, vector<8x32xf32>
      tpu.vector_store %arg8[%c0_29, %c0_30], %38 {strides = array<i32>} : memref<8x32xf32, #tpu.memory_space<vmem>>, vector<8x32xf32>,
    }
    %c4_i32_1 = arith.constant 4 : i32
    %c0_2 = arith.constant 0 : index
    %c0_3 = arith.constant 0 : index
    %3 = vector.load %arg8[%c0_2, %c0_3] : memref<8x32xf32, #tpu.memory_space<vmem>>, vector<8x32xf32>
    %c0_4 = arith.constant 0 : index
    %c0_5 = arith.constant 0 : index
    %4 = vector.load %arg6[%c0_4, %c0_5] : memref<1x32xf32, #tpu.memory_space<vmem>>, vector<1x32xf32>
    %5 = vector.broadcast %4 : vector<1x32xf32> to vector<8x32xf32>
    %6 = arith.addf %3, %5 : vector<8x32xf32>
    %c0_6 = arith.constant 0 : index
    %c0_7 = arith.constant 0 : index
    %c0_8 = arith.constant 0 : index
    %7 = vector.load %arg7[%c0_6, %c0_7, %c0_8] : memref<1x8x32xf32, #tpu.memory_space<vmem>>, vector<1x8x32xf32>
    %8 = vector.shape_cast %7 : vector<1x8x32xf32> to vector<8x32xf32>
    %9 = vector.shape_cast %6 : vector<8x32xf32> to vector<1x8x32xf32>
    tpu.vector_store %arg7[%c0_6, %c0_7, %c0_8], %9 {strides = array<i32>} : memref<1x8x32xf32, #tpu.memory_space<vmem>>, vector<1x8x32xf32>,
    return
  }
  func.func @transform_0(%arg0: i32, %arg1: i32) -> (i32, i32, i32, i32) {
    %c0_i32 = arith.constant 0 : i32
    %c0_i32_0 = arith.constant 0 : i32
    %c0_i32_1 = arith.constant 0 : i32
    return %arg0, %c0_i32, %arg1, %c0_i32_0 : i32, i32, i32, i32
  }
  func.func @transform_1(%arg0: i32, %arg1: i32) -> (i32, i32, i32, i32) {
    %c0_i32 = arith.constant 0 : i32
    %c0_i32_0 = arith.constant 0 : i32
    %c0_i32_1 = arith.constant 0 : i32
    %c0_i32_2 = arith.constant 0 : i32
    return %arg0, %c0_i32, %c0_i32_0, %c0_i32_1 : i32, i32, i32, i32
  }
  func.func @transform_2(%arg0: i32, %arg1: i32) -> (i32, i32, i32, i32) {
    %c0_i32 = arith.constant 0 : i32
    %c0_i32_0 = arith.constant 0 : i32
    %c0_i32_1 = arith.constant 0 : i32
    %c0_i32_2 = arith.constant 0 : i32
    return %arg0, %c0_i32, %c0_i32_0, %c0_i32_1 : i32, i32, i32, i32
  }
  func.func @transform_3(%arg0: i32, %arg1: i32) -> (i32, i32, i32) {
    %c0_i32 = arith.constant 0 : i32
    %c0_i32_0 = arith.constant 0 : i32
    %c0_i32_1 = arith.constant 0 : i32
    %c0_i32_2 = arith.constant 0 : i32
    return %c0_i32, %c0_i32_0, %c0_i32_1 : i32, i32, i32
  }
  func.func @transform_4(%arg0: i32, %arg1: i32) -> (i32, i32) {
    %c0_i32 = arith.constant 0 : i32
    %c0_i32_0 = arith.constant 0 : i32
    %c0_i32_1 = arith.constant 0 : i32
    return %c0_i32, %c0_i32_0 : i32, i32
  }
  func.func @transform_5(%arg0: i32, %arg1: i32) -> (i32, i32, i32) {
    %c0_i32 = arith.constant 0 : i32
    %c0_i32_0 = arith.constant 0 : i32
    return %arg0, %arg1, %c0_i32 : i32, i32, i32
  }
}

</mosaic_0001>

<llo_original>
// kernel: tpu_custom_call.1
$region0: #{tpu_custom_call.1}
  #allocation0 [shape = 'u32[]', space=smem, size = 0x4, offset = 0x4, fixed_abs, tag = 'smem constant byte address 0x4 - core index']
  #allocation1 [shape = 'u32[144,128]{1,0:T(1,128)}', space=vmem, size = 0x12000, scoped, tag = 'internal scratch']
  #allocation2 [shape = 'f32[8,32]{1,0:T(8,128)}', space=vmem, size = 0x1000, scoped, tag = 'scratch operand']
  %s0 = inlined_call_operand.hbm [shape: f32[2,4,8,8], index: 0, kind: input, shape index: {}]
  %s1 = inlined_call_operand.hbm [shape: f32[2,4,8,8], index: 1, kind: input, shape index: {}]
  %s2 = inlined_call_operand.hbm [shape: f32[2,4,8,8], index: 2, kind: input, shape index: {}]
  %s3 = inlined_call_operand.hbm [shape: f32[4,8,32], index: 3, kind: input, shape index: {}]
  %s4 = inlined_call_operand.vmem [shape: f32[1,32], index: 4, kind: input, shape index: {}]
  %s5 = inlined_call_operand.hbm [shape: f32[2,8,32], index: 5, kind: output, shape index: {}]
  %s6 = sld [smem:[#allocation0]]
  $region76: #{tpu_custom_call.1} parent=0
    _
  %s8 = ssub.s32 1, %s6
  %s9 = scalar_select 0, %s8, %s6
  $region1: #{tpu_custom_call.1} parent=0
    #allocation3 [shape = 'u8[32768]{0}', space=vmem, size = 0x8000, scoped, tag = 'input window, operand 0']
    #allocation4 [shape = 's32[2]{0}', space=sflag, size = 0x8, scoped, tag = 'scoped memory for tpu_custom_call.1']
    #allocation5 [shape = 's32[2]{0}', space=sflag, size = 0x8, scoped, tag = 'scoped memory for tpu_custom_call.1']
    #allocation6 [shape = 'u8[32768]{0}', space=vmem, size = 0x8000, scoped, tag = 'input window, operand 1']
    #allocation7 [shape = 's32[2]{0}', space=sflag, size = 0x8, scoped, tag = 'scoped memory for tpu_custom_call.1']
    #allocation8 [shape = 'u8[32768]{0}', space=vmem, size = 0x8000, scoped, tag = 'input window, operand 2']
    #allocation9 [shape = 'u8[16384]{0}', space=vmem, size = 0x4000, scoped, tag = 'input window, operand 3, single buffered']
    #allocation10 [shape = 's32[1]{0}', space=sflag, size = 0x4, scoped, tag = 'scoped memory for tpu_custom_call.1']
    #allocation11 [shape = 'u8[8192]{0}', space=vmem, size = 0x2000, scoped, tag = 'output window, operand 0']
    %10 = vsyncpa [#allocation4], 0
    %s11 = scalar_lea.sflag [#allocation4], 1
    %12 = vsyncpa %s11, 0
    %13 = vsyncpa [#allocation7], 0
    %s14 = scalar_lea.sflag [#allocation7], 1
    %15 = vsyncpa %s14, 0
    %16 = vsyncpa [#allocation10], 0
    %17 = vsyncpa [#allocation5], 0
    %s18 = scalar_lea.sflag [#allocation5], 1
    %19 = vsyncpa %s18, 0
    loop: start=0, step=1, limit=4
    $region2: #{tpu_custom_call.1} parent=1 // loop_pre_header
      _
    $region3: #{tpu_custom_call.1} parent=1 // loop_header
      %s21 = sphi 0, %s25
      %p22 = scmp.ge.s32.totalorder %s21, 4
      %s28 = sphi 0, %s40
      %s29 = sphi 0, %s36
      %s30 = sphi 0, %s28
      %s31 = sphi 0, %s29
      %s32 = sphi 0, %s30
      %s33 = sphi 0, %s31
      %s45 = sphi 0, %s47
      %s48 = sphi 0, %s45
      %s49 = sphi 0, %s48
      %s65 = sphi 0, %s49
      %s71 = sphi 0, %s73
      %s74 = sphi 0, %s71
      %s75 = sphi 0, %s74
      %s91 = sphi 0, %s75
      %s97 = sphi 0, %s99
      %s100 = sphi 0, %s97
      %s101 = sphi 0, %s100
      %s117 = sphi 0, %s101
      %s121 = sphi 0, %s121
      %s123 = sphi 0, %s121
      %s124 = sphi 0, %s123
      %s138 = sphi 0, %s124
      %s142 = sphi 0, %s142
      %s144 = sphi 0, %s142
      %s145 = sphi 0, %s144
      %s159 = sphi 0, %s145
      %s167 = sphi 0, %s169
      %s170 = sphi 0, %s167
      %s171 = sphi 0, %s170
      %s187 = sphi 0, %s171
    $region4: #{tpu_custom_call.1} parent=1 // loop_header_branch
      %24 = sbr.rel (%p22) target = $region8
    $region5: #{tpu_custom_call.1} parent=1 // loop_body
      %s26 = ssub.s32 %s21, 1
      %s27 = ssub.s32 %s21, 2
      %s34 = sadd.s32 1, %s29
      %p35 = scmp.ge.s32.totalorder %s34, 1
      %s36 = scalar_select %p35, 0, %s34
      %s37 = sadd.s32 1, %s28
      %s38 = scalar_select %p35, %s37, %s28
      %p39 = scmp.ge.s32.totalorder %s38, 2
      %s40 = scalar_select %p39, 0, %s38
      %s41 = ssub.s32 %s28, %s40
      %s42 = ssub.s32 %s29, %s36
      %s43 = sor.u32 %s41, %s42
      %p44 = scmp.eq.s32.totalorder %s43, 0
      %s46 = sadd.s32 %s45, 1
      %s47 = scalar_select %p44, %s45, %s46
      %p50 = pneg %p44
      %p51 = scmp.eq.s32.totalorder %s21, 1
      %p52 = por %p50, %p51
      %p53 = scmp.ne.s32.totalorder %s45, %s48
      %p54 = scmp.eq.s32.totalorder %s21, 0
      %p55 = por %p53, %p54
      %p56 = scmp.ne.s32.totalorder %s45, %s48
      %p57 = scmp.eq.s32.totalorder %s26, 1
      %p58 = por %p56, %p57
      %p59 = scmp.ne.s32.totalorder %s48, %s49
      %p60 = scmp.eq.s32.totalorder %s26, 0
      %p61 = por %p59, %p60
      %p62 = scmp.ne.s32.totalorder %s48, %s49
      %p63 = scmp.eq.s32.totalorder %s27, 1
      %p64 = por %p62, %p63
      %p66 = scmp.ne.s32.totalorder %s49, %s65
      %p67 = scmp.eq.s32.totalorder %s27, 0
      %p68 = por %p66, %p67
      %s69 = ssub.s32 %s28, %s40
      %p70 = scmp.eq.s32.totalorder %s69, 0
      %s72 = sadd.s32 %s71, 1
      %s73 = scalar_select %p70, %s71, %s72
      %p76 = pneg %p70
      %p77 = scmp.eq.s32.totalorder %s21, 1
      %p78 = por %p76, %p77
      %p79 = scmp.ne.s32.totalorder %s71, %s74
      %p80 = scmp.eq.s32.totalorder %s21, 0
      %p81 = por %p79, %p80
      %p82 = scmp.ne.s32.totalorder %s71, %s74
      %p83 = scmp.eq.s32.totalorder %s26, 1
      %p84 = por %p82, %p83
      %p85 = scmp.ne.s32.totalorder %s74, %s75
      %p86 = scmp.eq.s32.totalorder %s26, 0
      %p87 = por %p85, %p86
      %p88 = scmp.ne.s32.totalorder %s74, %s75
      %p89 = scmp.eq.s32.totalorder %s27, 1
      %p90 = por %p88, %p89
      %p92 = scmp.ne.s32.totalorder %s75, %s91
      %p93 = scmp.eq.s32.totalorder %s27, 0
      %p94 = por %p92, %p93
      %s95 = ssub.s32 %s28, %s40
      %p96 = scmp.eq.s32.totalorder %s95, 0
      %s98 = sadd.s32 %s97, 1
      %s99 = scalar_select %p96, %s97, %s98
      %p102 = pneg %p96
      %p103 = scmp.eq.s32.totalorder %s21, 1
      %p104 = por %p102, %p103
      %p105 = scmp.ne.s32.totalorder %s97, %s100
      %p106 = scmp.eq.s32.totalorder %s21, 0
      %p107 = por %p105, %p106
      %p108 = scmp.ne.s32.totalorder %s97, %s100
      %p109 = scmp.eq.s32.totalorder %s26, 1
      %p110 = por %p108, %p109
      %p111 = scmp.ne.s32.totalorder %s100, %s101
      %p112 = scmp.eq.s32.totalorder %s26, 0
      %p113 = por %p111, %p112
      %p114 = scmp.ne.s32.totalorder %s100, %s101
      %p115 = scmp.eq.s32.totalorder %s27, 1
      %p116 = por %p114, %p115
      %p118 = scmp.ne.s32.totalorder %s101, %s117
      %p119 = scmp.eq.s32.totalorder %s27, 0
      %p120 = por %p118, %p119
      %s122 = sadd.s32 %s121, 1
      %p125 = scmp.eq.s32.totalorder %s21, 1
      %p126 = scmp.ne.s32.totalorder %s121, %s123
      %p127 = scmp.eq.s32.totalorder %s21, 0
      %p128 = por %p126, %p127
      %p129 = scmp.ne.s32.totalorder %s121, %s123
      %p130 = scmp.eq.s32.totalorder %s26, 1
      %p131 = por %p129, %p130
      %p132 = scmp.ne.s32.totalorder %s123, %s124
      %p133 = scmp.eq.s32.totalorder %s26, 0
      %p134 = por %p132, %p133
      %p135 = scmp.ne.s32.totalorder %s123, %s124
      %p136 = scmp.eq.s32.totalorder %s27, 1
      %p137 = por %p135, %p136
      %p139 = scmp.ne.s32.totalorder %s124, %s138
      %p140 = scmp.eq.s32.totalorder %s27, 0
      %p141 = por %p139, %p140
      %s143 = sadd.s32 %s142, 1
      %p146 = scmp.eq.s32.totalorder %s21, 1
      %p147 = scmp.ne.s32.totalorder %s142, %s144
      %p148 = scmp.eq.s32.totalorder %s21, 0
      %p149 = por %p147, %p148
      %p150 = scmp.ne.s32.totalorder %s142, %s144
      %p151 = scmp.eq.s32.totalorder %s26, 1
      %p152 = por %p150, %p151
      %p153 = scmp.ne.s32.totalorder %s144, %s145
      %p154 = scmp.eq.s32.totalorder %s26, 0
      %p155 = por %p153, %p154
      %p156 = scmp.ne.s32.totalorder %s144, %s145
      %p157 = scmp.eq.s32.totalorder %s27, 1
      %p158 = por %p156, %p157
      %p160 = scmp.ne.s32.totalorder %s145, %s159
      %p161 = scmp.eq.s32.totalorder %s27, 0
      %p162 = por %p160, %p161
      %s163 = ssub.s32 %s28, %s40
      %s164 = ssub.s32 %s29, %s36
      %s165 = sor.u32 %s163, %s164
      %p166 = scmp.eq.s32.totalorder %s165, 0
      %s168 = sadd.s32 %s167, 1
      %s169 = scalar_select %p166, %s167, %s168
      %p172 = pneg %p166
      %p173 = scmp.eq.s32.totalorder %s21, 1
      %p174 = por %p172, %p173
      %p175 = scmp.ne.s32.totalorder %s167, %s170
      %p176 = scmp.eq.s32.totalorder %s21, 0
      %p177 = por %p175, %p176
      %p178 = scmp.ne.s32.totalorder %s167, %s170
      %p179 = scmp.eq.s32.totalorder %s26, 1
      %p180 = por %p178, %p179
      %p181 = scmp.ne.s32.totalorder %s170, %s171
      %p182 = scmp.eq.s32.totalorder %s26, 0
      %p183 = por %p181, %p182
      %p184 = scmp.ne.s32.totalorder %s170, %s171
      %p185 = scmp.eq.s32.totalorder %s27, 1
      %p186 = por %p184, %p185
      %p188 = scmp.ne.s32.totalorder %s171, %s187
      %p189 = scmp.eq.s32.totalorder %s27, 0
      %p190 = por %p188, %p189
      %p191 = scmp.le.s32.totalorder 1, %s21
      %p192 = scmp.lt.s32.totalorder %s21, 3
      %p193 = pnand %p191, %p192
      %p194 = pneg %p193
      // Predicated region
      $region9: #{tpu_custom_call.1} parent=5 // pred_check
        _
      $region10: #{tpu_custom_call.1} parent=5 // pred_check_branch
        %196 = sbr.rel (%p193) target = $region12
      $region11: #{tpu_custom_call.1} parent=5 // pred_region
        %s197 = ssub.s32 %s21, 1
        // Predicated region
        $region13: #{tpu_custom_call.1} parent=11 // pred_check
          %p198 = pneg %p134
        $region14: #{tpu_custom_call.1} parent=11 // pred_check_branch
          %200 = sbr.rel (%p198) target = $region16
        $region15: #{tpu_custom_call.1} parent=11 // pred_region
          %s202 = ssub.s32 512, 512
          %203 = vsyncadd [#allocation10], %s202
          %s204 = sshll.u32 [#allocation9], 4
          %s205 = int_to_ptr.vmem [resolvable:$true] %s204
          %210 = dma.hbm_to_vmem [thread:$0]  %s3, 512, %s205, [#allocation10], 128, 128, 8
        $region16: #{tpu_custom_call.1} parent=11 // pred_fallthru
          _
        // Predicated region
        $region17: #{tpu_custom_call.1} parent=11 // pred_check
          %p211 = pneg %p155
        $region18: #{tpu_custom_call.1} parent=11 // pred_check_branch
          %213 = sbr.rel (%p211) target = $region20
        $region19: #{tpu_custom_call.1} parent=11 // pred_region
          _
        $region20: #{tpu_custom_call.1} parent=11 // pred_fallthru
          _
      $region12: #{tpu_custom_call.1} parent=5 // pred_fallthru
        _
      %p214 = scmp.lt.s32.totalorder %s21, 2
      // Predicated region
      $region21: #{tpu_custom_call.1} parent=5 // pred_check
        %p215 = pneg %p214
      $region22: #{tpu_custom_call.1} parent=5 // pred_check_branch
        %217 = sbr.rel (%p215) target = $region24
      $region23: #{tpu_custom_call.1} parent=5 // pred_region
        // Predicated region
        $region25: #{tpu_custom_call.1} parent=23 // pred_check
          %p218 = pneg %p55
        $region26: #{tpu_custom_call.1} parent=23 // pred_check_branch
          %220 = sbr.rel (%p218) target = $region28
        $region27: #{tpu_custom_call.1} parent=23 // pred_region
          %s221 = sand.u32 %s45, 1
          %s222 = scalar_lea.sflag [#allocation4], %s221
          %s223 = sand.u32 %s45, 1
          %s224 = smul.addr %s223, 32
          %s225 = scalar_lea.vmem [#allocation3], %s224
          %s227 = ssub.s32 512, 512
          %228 = vsyncadd %s222, %s227
          %s229 = smul.addr %s28, 4
          %s230 = sadd.s32 %s29, %s229
          %s231 = smul.addr %s230, 128
          %s232 = scalar_lea.hbm %s0, %s231
          %s233 = sshll.u32 %s225, 4
          %s234 = int_to_ptr.vmem [resolvable:$true] %s233
          %239 = dma.hbm_to_vmem [thread:$0]  %s232, 512, %s234, %s222, 128, 128, 8
        $region28: #{tpu_custom_call.1} parent=23 // pred_fallthru
          _
        // Predicated region
        $region29: #{tpu_custom_call.1} parent=23 // pred_check
          %p240 = pneg %p81
        $region30: #{tpu_custom_call.1} parent=23 // pred_check_branch
          %242 = sbr.rel (%p240) target = $region32
        $region31: #{tpu_custom_call.1} parent=23 // pred_region
          %s243 = sand.u32 %s21, 1
          %s244 = scalar_lea.sflag [#allocation7], %s243
          %s245 = sand.u32 %s71, 1
          %s246 = smul.addr %s245, 32
          %s247 = scalar_lea.vmem [#allocation6], %s246
          %s249 = ssub.s32 512, 512
          %250 = vsyncadd %s244, %s249
          %s251 = smul.addr %s28, 4
          %s252 = smul.addr %s251, 128
          %s253 = scalar_lea.hbm %s1, %s252
          %s254 = sshll.u32 %s247, 4
          %s255 = int_to_ptr.vmem [resolvable:$true] %s254
          %260 = dma.hbm_to_vmem [thread:$0]  %s253, 512, %s255, %s244, 128, 128, 8
        $region32: #{tpu_custom_call.1} parent=23 // pred_fallthru
          _
        // Predicated region
        $region33: #{tpu_custom_call.1} parent=23 // pred_check
          %p261 = pneg %p107
        $region34: #{tpu_custom_call.1} parent=23 // pred_check_branch
          %263 = sbr.rel (%p261) target = $region36
        $region35: #{tpu_custom_call.1} parent=23 // pred_region
          %s264 = sand.u32 %s21, 1
          %s265 = scalar_lea.sflag [#allocation7], %s264
          %s266 = sand.u32 %s97, 1
          %s267 = smul.addr %s266, 32
          %s268 = scalar_lea.vmem [#allocation8], %s267
          %s270 = ssub.s32 512, 512
          %271 = vsyncadd %s265, %s270
          %s272 = smul.addr %s28, 4
          %s273 = smul.addr %s272, 128
          %s274 = scalar_lea.hbm %s2, %s273
          %s275 = sshll.u32 %s268, 4
          %s276 = int_to_ptr.vmem [resolvable:$true] %s275
          %281 = dma.hbm_to_vmem [thread:$0]  %s274, 512, %s276, %s265, 128, 128, 8
        $region36: #{tpu_custom_call.1} parent=23 // pred_fallthru
          _
      $region24: #{tpu_custom_call.1} parent=5 // pred_fallthru
        _
      %p282 = scmp.le.s32.totalorder 1, %s21
      %p283 = scmp.lt.s32.totalorder %s21, 3
      %p284 = pnand %p282, %p283
      %p285 = pneg %p284
      // Predicated region
      $region37: #{tpu_custom_call.1} parent=5 // pred_check
        _
      $region38: #{tpu_custom_call.1} parent=5 // pred_check_branch
        %287 = sbr.rel (%p284) target = $region40
      $region39: #{tpu_custom_call.1} parent=5 // pred_region
        %s288 = ssub.s32 %s21, 1
        %s289 = sand.u32 %s48, 1
        %s290 = scalar_lea.sflag [#allocation4], %s289
        %s291 = sand.u32 %s48, 1
        %s292 = smul.addr %s291, 32
        %s293 = scalar_lea.vmem [#allocation3], %s292
        // Predicated region
        $region41: #{tpu_custom_call.1} parent=39 // pred_check
          %p294 = pneg %p61
        $region42: #{tpu_custom_call.1} parent=39 // pred_check_branch
          %296 = sbr.rel (%p294) target = $region44
        $region43: #{tpu_custom_call.1} parent=39 // pred_region
          %297 = dma.done %s290, 512
        $region44: #{tpu_custom_call.1} parent=39 // pred_fallthru
          _
        %s298 = sand.u32 %s26, 1
        %s299 = scalar_lea.sflag [#allocation7], %s298
        %s300 = sand.u32 %s74, 1
        %s301 = smul.addr %s300, 32
        %s302 = scalar_lea.vmem [#allocation6], %s301
        // Predicated region
        $region45: #{tpu_custom_call.1} parent=39 // pred_check
          %p303 = pneg %p87
        $region46: #{tpu_custom_call.1} parent=39 // pred_check_branch
          %305 = sbr.rel (%p303) target = $region48
        $region47: #{tpu_custom_call.1} parent=39 // pred_region
          %306 = dma.done %s299, 512
        $region48: #{tpu_custom_call.1} parent=39 // pred_fallthru
          _
        %s307 = sand.u32 %s26, 1
        %s308 = scalar_lea.sflag [#allocation7], %s307
        %s309 = sand.u32 %s100, 1
        %s310 = smul.addr %s309, 32
        %s311 = scalar_lea.vmem [#allocation8], %s310
        // Predicated region
        $region49: #{tpu_custom_call.1} parent=39 // pred_check
          %p312 = pneg %p113
        $region50: #{tpu_custom_call.1} parent=39 // pred_check_branch
          %314 = sbr.rel (%p312) target = $region52
        $region51: #{tpu_custom_call.1} parent=39 // pred_region
          %315 = dma.done %s308, 512
        $region52: #{tpu_custom_call.1} parent=39 // pred_fallthru
          _
        // Predicated region
        $region53: #{tpu_custom_call.1} parent=39 // pred_check
          %p316 = pneg %p134
        $region54: #{tpu_custom_call.1} parent=39 // pred_check_branch
          %318 = sbr.rel (%p316) target = $region56
        $region55: #{tpu_custom_call.1} parent=39 // pred_region
          %319 = dma.done [#allocation10], 512
        $region56: #{tpu_custom_call.1} parent=39 // pred_fallthru
          _
        %s320 = sand.u32 %s48, 1
        %s321 = scalar_lea.sflag [#allocation4], %s320
        %s322 = sand.u32 %s48, 1
        %s323 = smul.addr %s322, 32
        %s324 = scalar_lea.vmem [#allocation3], %s323
        %p325 = pneg %p61
        %p326 = pneg %p58
        %s327 = sand.u32 %s26, 1
        %s328 = scalar_lea.sflag [#allocation7], %s327
        %s329 = sand.u32 %s74, 1
        %s330 = smul.addr %s329, 32
        %s331 = scalar_lea.vmem [#allocation6], %s330
        %p332 = pneg %p87
        %p333 = pneg %p84
        %s334 = sand.u32 %s26, 1
        %s335 = scalar_lea.sflag [#allocation7], %s334
        %s336 = sand.u32 %s100, 1
        %s337 = smul.addr %s336, 32
        %s338 = scalar_lea.vmem [#allocation8], %s337
        %p339 = pneg %p113
        %p340 = pneg %p110
        %p341 = pneg %p134
        %p342 = pneg %p131
        %p343 = pneg %p155
        %p344 = pneg %p152
        %p345 = pneg %p183
        %p346 = pneg %p180
        %s347 = sand.u32 %s170, 1
        %s348 = scalar_lea.sflag [#allocation5], %s347
        %s349 = sand.u32 %s170, 1
        %s350 = smul.addr %s349, 8
        %s351 = scalar_lea.vmem [#allocation11], %s350
        %vm352 = vcmask 261120
        %353 = vst.msk [vmem:[#allocation2] sm:$0xff] %vm352, 0.0
        loop: start=0, step=1, limit=4
        $region57: #{tpu_custom_call.1} parent=39 // loop_pre_header
          _
        $region58: #{tpu_custom_call.1} parent=39 // loop_header
          %s355 = sphi 0, %s359
          %p356 = scmp.ge.s32.totalorder %s355, 4
        $region59: #{tpu_custom_call.1} parent=39 // loop_header_branch
          %358 = sbr.rel (%p356) target = $region63
        $region60: #{tpu_custom_call.1} parent=39 // loop_body
          %s360 = smul.u32 %s355, 8
          %s361 = scalar_lea.vmem %s293, %s360 [#allocation3]
          %v362 = vld [vmem:[%s361] sm:$0xff]
          %s363 = scalar_lea.vmem %s302, %s360 [#allocation6]
          %v364 = vld [vmem:[%s363] sm:$0xff]
          %s365 = scalar_lea.vmem %s311, %s360 [#allocation8]
          %v366 = vld [vmem:[%s365] sm:$0xff]
          %vm367 = vcmask 64512
          %v369 = vsel %vm367, %v362, 0
          %v372 = vsel %vm367, %v364, 0
          %374 = vmatprep.subr.mxu0 0.0
          %v375 = vand.u32 %v372, 4294901760
          %376 = vmatpush1.xpose.msra.mxu0 %v375
          %377 = vmatprep.subr.mxu0 0.0
          %378 = vmatpush1.xpose.msra.mxu0 0.0
          %379 = vmatprep.subr.mxu0 0.0
          %380 = vmatpush1.xpose.msra.mxu0 0.0
          %381 = vmatprep.subr.mxu0 0.0
          %382 = vmatpush1.xpose.msra.mxu0 0.0
          %383 = vmatprep.subr.mxu0 0.0
          %384 = vmatpush1.xpose.msra.mxu0 0.0
          %385 = vmatprep.subr.mxu0 0.0
          %386 = vmatpush1.xpose.msra.mxu0 0.0
          %387 = vmatprep.subr.mxu0 0.0
          %388 = vmatpush1.xpose.msra.mxu0 0.0
          %389 = vmatprep.subr.mxu0 0.0
          %390 = vmatpush1.xpose.msra.mxu0 0.0
          %391 = vmatprep.subr.mxu0 0.0
          %392 = vmatpush1.xpose.msra.mxu0 0.0
          %393 = vmatprep.subr.mxu0 0.0
          %394 = vmatpush1.xpose.msra.mxu0 0.0
          %395 = vmatprep.subr.mxu0 0.0
          %396 = vmatpush1.xpose.msra.mxu0 0.0
          %397 = vmatprep.subr.mxu0 0.0
          %398 = vmatpush1.xpose.msra.mxu0 0.0
          %399 = vmatprep.subr.mxu0 0.0
          %400 = vmatpush1.xpose.msra.mxu0 0.0
          %401 = vmatprep.subr.mxu0 0.0
          %402 = vmatpush1.xpose.msra.mxu0 0.0
          %403 = vmatprep.subr.mxu0 0.0
          %404 = vmatpush1.xpose.msra.mxu0 0.0
          %405 = vmatprep.subr.mxu0 0.0
          %406 = vmatpush1.xpose.msra.mxu0 0.0
          %407 = vmatprep.subr.mxu0 0.0
          %408 = vmatpush1.xpose.msra.mxu0 0.0
          %409 = vmatprep.subr.mxu0 0.0
          %410 = vmatpush1.xpose.msra.mxu0 0.0
          %411 = vmatprep.subr.mxu0 0.0
          %412 = vmatpush1.xpose.msra.mxu0 0.0
          %413 = vmatprep.subr.mxu0 0.0
          %414 = vmatpush1.xpose.msra.mxu0 0.0
          %415 = vmatprep.subr.mxu0 0.0
          %416 = vmatpush1.xpose.msra.mxu0 0.0
          %417 = vmatprep.subr.mxu0 0.0
          %418 = vmatpush1.xpose.msra.mxu0 0.0
          %419 = vmatprep.subr.mxu0 0.0
          %420 = vmatpush1.xpose.msra.mxu0 0.0
          %421 = vmatprep.subr.mxu0 0.0
          %422 = vmatpush1.xpose.msra.mxu0 0.0
          %423 = vmatprep.subr.mxu0 0.0
          %424 = vmatpush1.xpose.msra.mxu0 0.0
          %425 = vmatprep.subr.mxu0 0.0
          %426 = vmatpush1.xpose.msra.mxu0 0.0
          %427 = vmatprep.subr.mxu0 0.0
          %428 = vmatpush1.xpose.msra.mxu0 0.0
          %429 = vmatprep.subr.mxu0 0.0
          %430 = vmatpush1.xpose.msra.mxu0 0.0
          %431 = vmatprep.subr.mxu0 0.0
          %432 = vmatpush1.xpose.msra.mxu0 0.0
          %433 = vmatprep.subr.mxu0 0.0
          %434 = vmatpush1.xpose.msra.mxu0 0.0
          %435 = vmatprep.subr.mxu0 0.0
          %436 = vmatpush1.xpose.msra.mxu0 0.0
          %437 = vmatprep.subr.mxu0 0.0
          %438 = vmatpush1.xpose.msra.mxu0 0.0
          %439 = vmatprep.mubr.f32.mxu0 0.0
          %v440 = vand.u32 %v369, 4294901760
          %v441 = vsub.f32 %v369, %v440
          %v442 = vand.u32 %v441, 4294901760
          %v443 = vsub.f32 %v441, %v442
          %v444 = vand.u32 %v443, 4294901760
          %445 = vmatmul.mubr.f32.gmra.mrb[0].mxu0 %v444
          %v446 = vpop.f32.mrb[0].mxu0
          %v447 = vadd.f32 0.0, %v446
          %v448 = vpop.f32.mrb[0].mxu0
          %449 = vdwg.mxu0
          %450 = vmatprep.subr.mxu0 0.0
          %v451 = vand.u32 %v372, 4294901760
          %v452 = vsub.f32 %v372, %v451
          %v453 = vand.u32 %v452, 4294901760
          %v454 = vsub.f32 %v452, %v453
          %v455 = vand.u32 %v454, 4294901760
          %456 = vmatpush1.xpose.msra.mxu0 %v455
          %457 = vmatprep.subr.mxu0 0.0
          %458 = vmatpush1.xpose.msra.mxu0 0.0
          %459 = vmatprep.subr.mxu0 0.0
          %460 = vmatpush1.xpose.msra.mxu0 0.0
          %461 = vmatprep.subr.mxu0 0.0
          %462 = vmatpush1.xpose.msra.mxu0 0.0
          %463 = vmatprep.subr.mxu0 0.0
          %464 = vmatpush1.xpose.msra.mxu0 0.0
          %465 = vmatprep.subr.mxu0 0.0
          %466 = vmatpush1.xpose.msra.mxu0 0.0
          %467 = vmatprep.subr.mxu0 0.0
          %468 = vmatpush1.xpose.msra.mxu0 0.0
          %469 = vmatprep.subr.mxu0 0.0
          %470 = vmatpush1.xpose.msra.mxu0 0.0
          %471 = vmatprep.subr.mxu0 0.0
          %472 = vmatpush1.xpose.msra.mxu0 0.0
          %473 = vmatprep.subr.mxu0 0.0
          %474 = vmatpush1.xpose.msra.mxu0 0.0
          %475 = vmatprep.subr.mxu0 0.0
          %476 = vmatpush1.xpose.msra.mxu0 0.0
          %477 = vmatprep.subr.mxu0 0.0
          %478 = vmatpush1.xpose.msra.mxu0 0.0
          %479 = vmatprep.subr.mxu0 0.0
          %480 = vmatpush1.xpose.msra.mxu0 0.0
          %481 = vmatprep.subr.mxu0 0.0
          %482 = vmatpush1.xpose.msra.mxu0 0.0
          %483 = vmatprep.subr.mxu0 0.0
          %484 = vmatpush1.xpose.msra.mxu0 0.0
          %485 = vmatprep.subr.mxu0 0.0
          %486 = vmatpush1.xpose.msra.mxu0 0.0
          %487 = vmatprep.subr.mxu0 0.0
          %488 = vmatpush1.xpose.msra.mxu0 0.0
          %489 = vmatprep.subr.mxu0 0.0
          %490 = vmatpush1.xpose.msra.mxu0 0.0
          %491 = vmatprep.subr.mxu0 0.0
          %492 = vmatpush1.xpose.msra.mxu0 0.0
          %493 = vmatprep.subr.mxu0 0.0
          %494 = vmatpush1.xpose.msra.mxu0 0.0
          %495 = vmatprep.subr.mxu0 0.0
          %496 = vmatpush1.xpose.msra.mxu0 0.0
          %497 = vmatprep.subr.mxu0 0.0
          %498 = vmatpush1.xpose.msra.mxu0 0.0
          %499 = vmatprep.subr.mxu0 0.0
          %500 = vmatpush1.xpose.msra.mxu0 0.0
          %501 = vmatprep.subr.mxu0 0.0
          %502 = vmatpush1.xpose.msra.mxu0 0.0
          %503 = vmatprep.subr.mxu0 0.0
          %504 = vmatpush1.xpose.msra.mxu0 0.0
          %505 = vmatprep.subr.mxu0 0.0
          %506 = vmatpush1.xpose.msra.mxu0 0.0
          %507 = vmatprep.subr.mxu0 0.0
          %508 = vmatpush1.xpose.msra.mxu0 0.0
          %509 = vmatprep.subr.mxu0 0.0
          %510 = vmatpush1.xpose.msra.mxu0 0.0
          %511 = vmatprep.subr.mxu0 0.0
          %512 = vmatpush1.xpose.msra.mxu0 0.0
          %513 = vmatprep.subr.mxu0 0.0
          %514 = vmatpush1.xpose.msra.mxu0 0.0
          %515 = vmatprep.subr.mxu0 0.0
          %516 = vmatpush1.xpose.msra.mxu0 0.0
          %517 = vmatprep.subr.mxu0 0.0
          %518 = vmatpush1.xpose.msra.mxu0 0.0
          %519 = vmatprep.mubr.f32.mxu0 0.0
          %v520 = vand.u32 %v369, 4294901760
          %521 = vmatmul.mubr.f32.gmra.mrb[0].mxu0 %v520
          %v522 = vpop.f32.mrb[0].mxu0
          %v523 = vadd.f32 %v447, %v522
          %v524 = vpop.f32.mrb[0].mxu0
          %525 = vdwg.mxu0
          %526 = vmatprep.subr.mxu0 0.0
          %v527 = vand.u32 %v372, 4294901760
          %v528 = vsub.f32 %v372, %v527
          %529 = vmatpush1.xpose.msra.mxu0 %v528
          %530 = vmatprep.subr.mxu0 0.0
          %531 = vmatpush1.xpose.msra.mxu0 0.0
          %532 = vmatprep.subr.mxu0 0.0
          %533 = vmatpush1.xpose.msra.mxu0 0.0
          %534 = vmatprep.subr.mxu0 0.0
          %535 = vmatpush1.xpose.msra.mxu0 0.0
          %536 = vmatprep.subr.mxu0 0.0
          %537 = vmatpush1.xpose.msra.mxu0 0.0
          %538 = vmatprep.subr.mxu0 0.0
          %539 = vmatpush1.xpose.msra.mxu0 0.0
          %540 = vmatprep.subr.mxu0 0.0
          %541 = vmatpush1.xpose.msra.mxu0 0.0
          %542 = vmatprep.subr.mxu0 0.0
          %543 = vmatpush1.xpose.msra.mxu0 0.0
          %544 = vmatprep.subr.mxu0 0.0
          %545 = vmatpush1.xpose.msra.mxu0 0.0
          %546 = vmatprep.subr.mxu0 0.0
          %547 = vmatpush1.xpose.msra.mxu0 0.0
          %548 = vmatprep.subr.mxu0 0.0
          %549 = vmatpush1.xpose.msra.mxu0 0.0
          %550 = vmatprep.subr.mxu0 0.0
          %551 = vmatpush1.xpose.msra.mxu0 0.0
          %552 = vmatprep.subr.mxu0 0.0
          %553 = vmatpush1.xpose.msra.mxu0 0.0
          %554 = vmatprep.subr.mxu0 0.0
          %555 = vmatpush1.xpose.msra.mxu0 0.0
          %556 = vmatprep.subr.mxu0 0.0
          %557 = vmatpush1.xpose.msra.mxu0 0.0
          %558 = vmatprep.subr.mxu0 0.0
          %559 = vmatpush1.xpose.msra.mxu0 0.0
          %560 = vmatprep.subr.mxu0 0.0
          %561 = vmatpush1.xpose.msra.mxu0 0.0
          %562 = vmatprep.subr.mxu0 0.0
          %563 = vmatpush1.xpose.msra.mxu0 0.0
          %564 = vmatprep.subr.mxu0 0.0
          %565 = vmatpush1.xpose.msra.mxu0 0.0
          %566 = vmatprep.subr.mxu0 0.0
          %567 = vmatpush1.xpose.msra.mxu0 0.0
          %568 = vmatprep.subr.mxu0 0.0
          %569 = vmatpush1.xpose.msra.mxu0 0.0
          %570 = vmatprep.subr.mxu0 0.0
          %571 = vmatpush1.xpose.msra.mxu0 0.0
          %572 = vmatprep.subr.mxu0 0.0
          %573 = vmatpush1.xpose.msra.mxu0 0.0
          %574 = vmatprep.subr.mxu0 0.0
          %575 = vmatpush1.xpose.msra.mxu0 0.0
          %576 = vmatprep.subr.mxu0 0.0
          %577 = vmatpush1.xpose.msra.mxu0 0.0
          %578 = vmatprep.subr.mxu0 0.0
          %579 = vmatpush1.xpose.msra.mxu0 0.0
          %580 = vmatprep.subr.mxu0 0.0
          %581 = vmatpush1.xpose.msra.mxu0 0.0
          %582 = vmatprep.subr.mxu0 0.0
          %583 = vmatpush1.xpose.msra.mxu0 0.0
          %584 = vmatprep.subr.mxu0 0.0
          %585 = vmatpush1.xpose.msra.mxu0 0.0
          %586 = vmatprep.subr.mxu0 0.0
          %587 = vmatpush1.xpose.msra.mxu0 0.0
          %588 = vmatprep.subr.mxu0 0.0
          %589 = vmatpush1.xpose.msra.mxu0 0.0
          %590 = vmatprep.subr.mxu0 0.0
          %591 = vmatpush1.xpose.msra.mxu0 0.0
          %592 = vmatprep.mubr.f32.mxu0 0.0
          %v593 = vand.u32 %v369, 4294901760
          %v594 = vsub.f32 %v369, %v593
          %595 = vmatmul.mubr.f32.gmra.mrb[0].mxu0 %v594
          %v596 = vpop.f32.mrb[0].mxu0
          %v597 = vadd.f32 %v523, %v596
          %v598 = vpop.f32.mrb[0].mxu0
          %599 = vdwg.mxu0
          %600 = vmatprep.subr.mxu0 0.0
          %v601 = vand.u32 %v372, 4294901760
          %602 = vmatpush1.xpose.msra.mxu0 %v601
          %603 = vmatprep.subr.mxu0 0.0
          %604 = vmatpush1.xpose.msra.mxu0 0.0
          %605 = vmatprep.subr.mxu0 0.0
          %606 = vmatpush1.xpose.msra.mxu0 0.0
          %607 = vmatprep.subr.mxu0 0.0
          %608 = vmatpush1.xpose.msra.mxu0 0.0
          %609 = vmatprep.subr.mxu0 0.0
          %610 = vmatpush1.xpose.msra.mxu0 0.0
          %611 = vmatprep.subr.mxu0 0.0
          %612 = vmatpush1.xpose.msra.mxu0 0.0
          %613 = vmatprep.subr.mxu0 0.0
          %614 = vmatpush1.xpose.msra.mxu0 0.0
          %615 = vmatprep.subr.mxu0 0.0
          %616 = vmatpush1.xpose.msra.mxu0 0.0
          %617 = vmatprep.subr.mxu0 0.0
          %618 = vmatpush1.xpose.msra.mxu0 0.0
          %619 = vmatprep.subr.mxu0 0.0
          %620 = vmatpush1.xpose.msra.mxu0 0.0
          %621 = vmatprep.subr.mxu0 0.0
          %622 = vmatpush1.xpose.msra.mxu0 0.0
          %623 = vmatprep.subr.mxu0 0.0
          %624 = vmatpush1.xpose.msra.mxu0 0.0
          %625 = vmatprep.subr.mxu0 0.0
          %626 = vmatpush1.xpose.msra.mxu0 0.0
          %627 = vmatprep.subr.mxu0 0.0
          %628 = vmatpush1.xpose.msra.mxu0 0.0
          %629 = vmatprep.subr.mxu0 0.0
          %630 = vmatpush1.xpose.msra.mxu0 0.0
          %631 = vmatprep.subr.mxu0 0.0
          %632 = vmatpush1.xpose.msra.mxu0 0.0
          %633 = vmatprep.subr.mxu0 0.0
          %634 = vmatpush1.xpose.msra.mxu0 0.0
          %635 = vmatprep.subr.mxu0 0.0
          %636 = vmatpush1.xpose.msra.mxu0 0.0
          %637 = vmatprep.subr.mxu0 0.0
          %638 = vmatpush1.xpose.msra.mxu0 0.0
          %639 = vmatprep.subr.mxu0 0.0
          %640 = vmatpush1.xpose.msra.mxu0 0.0
          %641 = vmatprep.subr.mxu0 0.0
          %642 = vmatpush1.xpose.msra.mxu0 0.0
          %643 = vmatprep.subr.mxu0 0.0
          %644 = vmatpush1.xpose.msra.mxu0 0.0
          %645 = vmatprep.subr.mxu0 0.0
          %646 = vmatpush1.xpose.msra.mxu0 0.0
          %647 = vmatprep.subr.mxu0 0.0
          %648 = vmatpush1.xpose.msra.mxu0 0.0
          %649 = vmatprep.subr.mxu0 0.0
          %650 = vmatpush1.xpose.msra.mxu0 0.0
          %651 = vmatprep.subr.mxu0 0.0
          %652 = vmatpush1.xpose.msra.mxu0 0.0
          %653 = vmatprep.subr.mxu0 0.0
          %654 = vmatpush1.xpose.msra.mxu0 0.0
          %655 = vmatprep.subr.mxu0 0.0
          %656 = vmatpush1.xpose.msra.mxu0 0.0
          %657 = vmatprep.subr.mxu0 0.0
          %658 = vmatpush1.xpose.msra.mxu0 0.0
          %659 = vmatprep.subr.mxu0 0.0
          %660 = vmatpush1.xpose.msra.mxu0 0.0
          %661 = vmatprep.subr.mxu0 0.0
          %662 = vmatpush1.xpose.msra.mxu0 0.0
          %663 = vmatprep.subr.mxu0 0.0
          %664 = vmatpush1.xpose.msra.mxu0 0.0
          %665 = vmatprep.mubr.f32.mxu0 0.0
          %v666 = vand.u32 %v369, 4294901760
          %v667 = vsub.f32 %v369, %v666
          %v668 = vand.u32 %v667, 4294901760
          %669 = vmatmul.mubr.f32.gmra.mrb[0].mxu0 %v668
          %v670 = vpop.f32.mrb[0].mxu0
          %v671 = vadd.f32 %v597, %v670
          %v672 = vpop.f32.mrb[0].mxu0
          %673 = vdwg.mxu0
          %674 = vmatprep.subr.mxu0 0.0
          %v675 = vand.u32 %v372, 4294901760
          %v676 = vsub.f32 %v372, %v675
          %v677 = vand.u32 %v676, 4294901760
          %678 = vmatpush1.xpose.msra.mxu0 %v677
          %679 = vmatprep.subr.mxu0 0.0
          %680 = vmatpush1.xpose.msra.mxu0 0.0
          %681 = vmatprep.subr.mxu0 0.0
          %682 = vmatpush1.xpose.msra.mxu0 0.0
          %683 = vmatprep.subr.mxu0 0.0
          %684 = vmatpush1.xpose.msra.mxu0 0.0
          %685 = vmatprep.subr.mxu0 0.0
          %686 = vmatpush1.xpose.msra.mxu0 0.0
          %687 = vmatprep.subr.mxu0 0.0
          %688 = vmatpush1.xpose.msra.mxu0 0.0
          %689 = vmatprep.subr.mxu0 0.0
          %690 = vmatpush1.xpose.msra.mxu0 0.0
          %691 = vmatprep.subr.mxu0 0.0
          %692 = vmatpush1.xpose.msra.mxu0 0.0
          %693 = vmatprep.subr.mxu0 0.0
          %694 = vmatpush1.xpose.msra.mxu0 0.0
          %695 = vmatprep.subr.mxu0 0.0
          %696 = vmatpush1.xpose.msra.mxu0 0.0
          %697 = vmatprep.subr.mxu0 0.0
          %698 = vmatpush1.xpose.msra.mxu0 0.0
          %699 = vmatprep.subr.mxu0 0.0
          %700 = vmatpush1.xpose.msra.mxu0 0.0
          %701 = vmatprep.subr.mxu0 0.0
          %702 = vmatpush1.xpose.msra.mxu0 0.0
          %703 = vmatprep.subr.mxu0 0.0
          %704 = vmatpush1.xpose.msra.mxu0 0.0
          %705 = vmatprep.subr.mxu0 0.0
          %706 = vmatpush1.xpose.msra.mxu0 0.0
          %707 = vmatprep.subr.mxu0 0.0
          %708 = vmatpush1.xpose.msra.mxu0 0.0
          %709 = vmatprep.subr.mxu0 0.0
          %710 = vmatpush1.xpose.msra.mxu0 0.0
          %711 = vmatprep.subr.mxu0 0.0
          %712 = vmatpush1.xpose.msra.mxu0 0.0
          %713 = vmatprep.subr.mxu0 0.0
          %714 = vmatpush1.xpose.msra.mxu0 0.0
          %715 = vmatprep.subr.mxu0 0.0
          %716 = vmatpush1.xpose.msra.mxu0 0.0
          %717 = vmatprep.subr.mxu0 0.0
          %718 = vmatpush1.xpose.msra.mxu0 0.0
          %719 = vmatprep.subr.mxu0 0.0
          %720 = vmatpush1.xpose.msra.mxu0 0.0
          %721 = vmatprep.subr.mxu0 0.0
          %722 = vmatpush1.xpose.msra.mxu0 0.0
          %723 = vmatprep.subr.mxu0 0.0
          %724 = vmatpush1.xpose.msra.mxu0 0.0
          %725 = vmatprep.subr.mxu0 0.0
          %726 = vmatpush1.xpose.msra.mxu0 0.0
          %727 = vmatprep.subr.mxu0 0.0
          %728 = vmatpush1.xpose.msra.mxu0 0.0
          %729 = vmatprep.subr.mxu0 0.0
          %730 = vmatpush1.xpose.msra.mxu0 0.0
          %731 = vmatprep.subr.mxu0 0.0
          %732 = vmatpush1.xpose.msra.mxu0 0.0
          %733 = vmatprep.subr.mxu0 0.0
          %734 = vmatpush1.xpose.msra.mxu0 0.0
          %735 = vmatprep.subr.mxu0 0.0
          %736 = vmatpush1.xpose.msra.mxu0 0.0
          %737 = vmatprep.subr.mxu0 0.0
          %738 = vmatpush1.xpose.msra.mxu0 0.0
          %739 = vmatprep.subr.mxu0 0.0
          %740 = vmatpush1.xpose.msra.mxu0 0.0
          %741 = vmatprep.mubr.f32.mxu0 0.0
          %v742 = vand.u32 %v369, 4294901760
          %743 = vmatmul.mubr.f32.gmra.mrb[0].mxu0 %v742
          %v744 = vpop.f32.mrb[0].mxu0
          %v745 = vadd.f32 %v671, %v744
          %v746 = vpop.f32.mrb[0].mxu0
          %747 = vdwg.mxu0
          %748 = vmatprep.subr.mxu0 0.0
          %v749 = vand.u32 %v372, 4294901760
          %750 = vmatpush1.xpose.msra.mxu0 %v749
          %751 = vmatprep.subr.mxu0 0.0
          %752 = vmatpush1.xpose.msra.mxu0 0.0
          %753 = vmatprep.subr.mxu0 0.0
          %754 = vmatpush1.xpose.msra.mxu0 0.0
          %755 = vmatprep.subr.mxu0 0.0
          %756 = vmatpush1.xpose.msra.mxu0 0.0
          %757 = vmatprep.subr.mxu0 0.0
          %758 = vmatpush1.xpose.msra.mxu0 0.0
          %759 = vmatprep.subr.mxu0 0.0
          %760 = vmatpush1.xpose.msra.mxu0 0.0
          %761 = vmatprep.subr.mxu0 0.0
          %762 = vmatpush1.xpose.msra.mxu0 0.0
          %763 = vmatprep.subr.mxu0 0.0
          %764 = vmatpush1.xpose.msra.mxu0 0.0
          %765 = vmatprep.subr.mxu0 0.0
          %766 = vmatpush1.xpose.msra.mxu0 0.0
          %767 = vmatprep.subr.mxu0 0.0
          %768 = vmatpush1.xpose.msra.mxu0 0.0
          %769 = vmatprep.subr.mxu0 0.0
          %770 = vmatpush1.xpose.msra.mxu0 0.0
          %771 = vmatprep.subr.mxu0 0.0
          %772 = vmatpush1.xpose.msra.mxu0 0.0
          %773 = vmatprep.subr.mxu0 0.0
          %774 = vmatpush1.xpose.msra.mxu0 0.0
          %775 = vmatprep.subr.mxu0 0.0
          %776 = vmatpush1.xpose.msra.mxu0 0.0
          %777 = vmatprep.subr.mxu0 0.0
          %778 = vmatpush1.xpose.msra.mxu0 0.0
          %779 = vmatprep.subr.mxu0 0.0
          %780 = vmatpush1.xpose.msra.mxu0 0.0
          %781 = vmatprep.subr.mxu0 0.0
          %782 = vmatpush1.xpose.msra.mxu0 0.0
          %783 = vmatprep.subr.mxu0 0.0
          %784 = vmatpush1.xpose.msra.mxu0 0.0
          %785 = vmatprep.subr.mxu0 0.0
          %786 = vmatpush1.xpose.msra.mxu0 0.0
          %787 = vmatprep.subr.mxu0 0.0
          %788 = vmatpush1.xpose.msra.mxu0 0.0
          %789 = vmatprep.subr.mxu0 0.0
          %790 = vmatpush1.xpose.msra.mxu0 0.0
          %791 = vmatprep.subr.mxu0 0.0
          %792 = vmatpush1.xpose.msra.mxu0 0.0
          %793 = vmatprep.subr.mxu0 0.0
          %794 = vmatpush1.xpose.msra.mxu0 0.0
          %795 = vmatprep.subr.mxu0 0.0
          %796 = vmatpush1.xpose.msra.mxu0 0.0
          %797 = vmatprep.subr.mxu0 0.0
          %798 = vmatpush1.xpose.msra.mxu0 0.0
          %799 = vmatprep.subr.mxu0 0.0
          %800 = vmatpush1.xpose.msra.mxu0 0.0
          %801 = vmatprep.subr.mxu0 0.0
          %802 = vmatpush1.xpose.msra.mxu0 0.0
          %803 = vmatprep.subr.mxu0 0.0
          %804 = vmatpush1.xpose.msra.mxu0 0.0
          %805 = vmatprep.subr.mxu0 0.0
          %806 = vmatpush1.xpose.msra.mxu0 0.0
          %807 = vmatprep.subr.mxu0 0.0
          %808 = vmatpush1.xpose.msra.mxu0 0.0
          %809 = vmatprep.subr.mxu0 0.0
          %810 = vmatpush1.xpose.msra.mxu0 0.0
          %811 = vmatprep.subr.mxu0 0.0
          %812 = vmatpush1.xpose.msra.mxu0 0.0
          %813 = vmatprep.mubr.f32.mxu0 0.0
          %v814 = vand.u32 %v369, 4294901760
          %815 = vmatmul.mubr.f32.gmra.mrb[0].mxu0 %v814
          %v816 = vpop.f32.mrb[0].mxu0
          %v817 = vadd.f32 %v745, %v816
          %v818 = vpop.f32.mrb[0].mxu0
          %819 = vdwg.mxu0
          %v820 = vsel %vm367, %v817, -inf
          %821 = vmax.xlane.f32.xlu0 %v820
          %v822 = vpop.xlane.xlu0 %821
          %v823 = vsub.f32 %v817, %v822
          %v824 = vmul.f32 %v823, 1.442695
          %v825 = vpow.pop %v824
          %v826 = vsel %vm367, %v825, 0.0
          %827 = vadd.xlane.f32.xlu0 %v826
          %v828 = vpop.xlane.xlu0 %827
          %v830 = vsel %vm367, %v825, 0
          %832 = vmatprep.subr.mxu0 0.0
          %v833 = vand.u32 %v366, 4294901760
          %834 = vmatpush1.msra.mxu0 %v833
          %835 = vmatprep.subr.mxu0 0.0
          %836 = vmatpush1.msra.mxu0 0.0
          %837 = vmatprep.subr.mxu0 0.0
          %838 = vmatpush1.msra.mxu0 0.0
          %839 = vmatprep.subr.mxu0 0.0
          %840 = vmatpush1.msra.mxu0 0.0
          %841 = vmatprep.subr.mxu0 0.0
          %842 = vmatpush1.msra.mxu0 0.0
          %843 = vmatprep.subr.mxu0 0.0
          %844 = vmatpush1.msra.mxu0 0.0
          %845 = vmatprep.subr.mxu0 0.0
          %846 = vmatpush1.msra.mxu0 0.0
          %847 = vmatprep.subr.mxu0 0.0
          %848 = vmatpush1.msra.mxu0 0.0
          %849 = vmatprep.subr.mxu0 0.0
          %850 = vmatpush1.msra.mxu0 0.0
          %851 = vmatprep.subr.mxu0 0.0
          %852 = vmatpush1.msra.mxu0 0.0
          %853 = vmatprep.subr.mxu0 0.0
          %854 = vmatpush1.msra.mxu0 0.0
          %855 = vmatprep.subr.mxu0 0.0
          %856 = vmatpush1.msra.mxu0 0.0
          %857 = vmatprep.subr.mxu0 0.0
          %858 = vmatpush1.msra.mxu0 0.0
          %859 = vmatprep.subr.mxu0 0.0
          %860 = vmatpush1.msra.mxu0 0.0
          %861 = vmatprep.subr.mxu0 0.0
          %862 = vmatpush1.msra.mxu0 0.0
          %863 = vmatprep.subr.mxu0 0.0
          %864 = vmatpush1.msra.mxu0 0.0
          %865 = vmatprep.subr.mxu0 0.0
          %866 = vmatpush1.msra.mxu0 0.0
          %867 = vmatprep.subr.mxu0 0.0
          %868 = vmatpush1.msra.mxu0 0.0
          %869 = vmatprep.subr.mxu0 0.0
          %870 = vmatpush1.msra.mxu0 0.0
          %871 = vmatprep.subr.mxu0 0.0
          %872 = vmatpush1.msra.mxu0 0.0
          %873 = vmatprep.subr.mxu0 0.0
          %874 = vmatpush1.msra.mxu0 0.0
          %875 = vmatprep.subr.mxu0 0.0
          %876 = vmatpush1.msra.mxu0 0.0
          %877 = vmatprep.subr.mxu0 0.0
          %878 = vmatpush1.msra.mxu0 0.0
          %879 = vmatprep.subr.mxu0 0.0
          %880 = vmatpush1.msra.mxu0 0.0
          %881 = vmatprep.subr.mxu0 0.0
          %882 = vmatpush1.msra.mxu0 0.0
          %883 = vmatprep.subr.mxu0 0.0
          %884 = vmatpush1.msra.mxu0 0.0
          %885 = vmatprep.subr.mxu0 0.0
          %886 = vmatpush1.msra.mxu0 0.0
          %887 = vmatprep.subr.mxu0 0.0
          %888 = vmatpush1.msra.mxu0 0.0
          %889 = vmatprep.subr.mxu0 0.0
          %890 = vmatpush1.msra.mxu0 0.0
          %891 = vmatprep.subr.mxu0 0.0
          %892 = vmatpush1.msra.mxu0 0.0
          %893 = vmatprep.subr.mxu0 0.0
          %894 = vmatpush1.msra.mxu0 0.0
          %895 = vmatprep.subr.mxu0 0.0
          %896 = vmatpush1.msra.mxu0 0.0
          %897 = vmatprep.mubr.f32.mxu0 0.0
          %v898 = vand.u32 %v830, 4294901760
          %v899 = vsub.f32 %v830, %v898
          %v900 = vand.u32 %v899, 4294901760
          %v901 = vsub.f32 %v899, %v900
          %v902 = vand.u32 %v901, 4294901760
          %903 = vmatmul.mubr.f32.gmra.mrb[0].mxu0 %v902
          %v904 = vpop.f32.mrb[0].mxu0
          %v905 = vadd.f32 0.0, %v904
          %v906 = vpop.f32.mrb[0].mxu0
          %907 = vdwg.mxu0
          %908 = vmatprep.subr.mxu0 0.0
          %v909 = vand.u32 %v366, 4294901760
          %v910 = vsub.f32 %v366, %v909
          %v911 = vand.u32 %v910, 4294901760
          %v912 = vsub.f32 %v910, %v911
          %v913 = vand.u32 %v912, 4294901760
          %914 = vmatpush1.msra.mxu0 %v913
          %915 = vmatprep.subr.mxu0 0.0
          %916 = vmatpush1.msra.mxu0 0.0
          %917 = vmatprep.subr.mxu0 0.0
          %918 = vmatpush1.msra.mxu0 0.0
          %919 = vmatprep.subr.mxu0 0.0
          %920 = vmatpush1.msra.mxu0 0.0
          %921 = vmatprep.subr.mxu0 0.0
          %922 = vmatpush1.msra.mxu0 0.0
          %923 = vmatprep.subr.mxu0 0.0
          %924 = vmatpush1.msra.mxu0 0.0
          %925 = vmatprep.subr.mxu0 0.0
          %926 = vmatpush1.msra.mxu0 0.0
          %927 = vmatprep.subr.mxu0 0.0
          %928 = vmatpush1.msra.mxu0 0.0
          %929 = vmatprep.subr.mxu0 0.0
          %930 = vmatpush1.msra.mxu0 0.0
          %931 = vmatprep.subr.mxu0 0.0
          %932 = vmatpush1.msra.mxu0 0.0
          %933 = vmatprep.subr.mxu0 0.0
          %934 = vmatpush1.msra.mxu0 0.0
          %935 = vmatprep.subr.mxu0 0.0
          %936 = vmatpush1.msra.mxu0 0.0
          %937 = vmatprep.subr.mxu0 0.0
          %938 = vmatpush1.msra.mxu0 0.0
          %939 = vmatprep.subr.mxu0 0.0
          %940 = vmatpush1.msra.mxu0 0.0
          %941 = vmatprep.subr.mxu0 0.0
          %942 = vmatpush1.msra.mxu0 0.0
          %943 = vmatprep.subr.mxu0 0.0
          %944 = vmatpush1.msra.mxu0 0.0
          %945 = vmatprep.subr.mxu0 0.0
          %946 = vmatpush1.msra.mxu0 0.0
          %947 = vmatprep.subr.mxu0 0.0
          %948 = vmatpush1.msra.mxu0 0.0
          %949 = vmatprep.subr.mxu0 0.0
          %950 = vmatpush1.msra.mxu0 0.0
          %951 = vmatprep.subr.mxu0 0.0
          %952 = vmatpush1.msra.mxu0 0.0
          %953 = vmatprep.subr.mxu0 0.0
          %954 = vmatpush1.msra.mxu0 0.0
          %955 = vmatprep.subr.mxu0 0.0
          %956 = vmatpush1.msra.mxu0 0.0
          %957 = vmatprep.subr.mxu0 0.0
          %958 = vmatpush1.msra.mxu0 0.0
          %959 = vmatprep.subr.mxu0 0.0
          %960 = vmatpush1.msra.mxu0 0.0
          %961 = vmatprep.subr.mxu0 0.0
          %962 = vmatpush1.msra.mxu0 0.0
          %963 = vmatprep.subr.mxu0 0.0
          %964 = vmatpush1.msra.mxu0 0.0
          %965 = vmatprep.subr.mxu0 0.0
          %966 = vmatpush1.msra.mxu0 0.0
          %967 = vmatprep.subr.mxu0 0.0
          %968 = vmatpush1.msra.mxu0 0.0
          %969 = vmatprep.subr.mxu0 0.0
          %970 = vmatpush1.msra.mxu0 0.0
          %971 = vmatprep.subr.mxu0 0.0
          %972 = vmatpush1.msra.mxu0 0.0
          %973 = vmatprep.subr.mxu0 0.0
          %974 = vmatpush1.msra.mxu0 0.0
          %975 = vmatprep.subr.mxu0 0.0
          %976 = vmatpush1.msra.mxu0 0.0
          %977 = vmatprep.mubr.f32.mxu0 0.0
          %v978 = vand.u32 %v830, 4294901760
          %979 = vmatmul.mubr.f32.gmra.mrb[0].mxu0 %v978
          %v980 = vpop.f32.mrb[0].mxu0
          %v981 = vadd.f32 %v905, %v980
          %v982 = vpop.f32.mrb[0].mxu0
          %983 = vdwg.mxu0
          %984 = vmatprep.subr.mxu0 0.0
          %v985 = vand.u32 %v366, 4294901760
          %v986 = vsub.f32 %v366, %v985
          %987 = vmatpush1.msra.mxu0 %v986
          %988 = vmatprep.subr.mxu0 0.0
          %989 = vmatpush1.msra.mxu0 0.0
          %990 = vmatprep.subr.mxu0 0.0
          %991 = vmatpush1.msra.mxu0 0.0
          %992 = vmatprep.subr.mxu0 0.0
          %993 = vmatpush1.msra.mxu0 0.0
          %994 = vmatprep.subr.mxu0 0.0
          %995 = vmatpush1.msra.mxu0 0.0
          %996 = vmatprep.subr.mxu0 0.0
          %997 = vmatpush1.msra.mxu0 0.0
          %998 = vmatprep.subr.mxu0 0.0
          %999 = vmatpush1.msra.mxu0 0.0
          %1000 = vmatprep.subr.mxu0 0.0
          %1001 = vmatpush1.msra.mxu0 0.0
          %1002 = vmatprep.subr.mxu0 0.0
          %1003 = vmatpush1.msra.mxu0 0.0
          %1004 = vmatprep.subr.mxu0 0.0
          %1005 = vmatpush1.msra.mxu0 0.0
          %1006 = vmatprep.subr.mxu0 0.0
          %1007 = vmatpush1.msra.mxu0 0.0
          %1008 = vmatprep.subr.mxu0 0.0
          %1009 = vmatpush1.msra.mxu0 0.0
          %1010 = vmatprep.subr.mxu0 0.0
          %1011 = vmatpush1.msra.mxu0 0.0
          %1012 = vmatprep.subr.mxu0 0.0
          %1013 = vmatpush1.msra.mxu0 0.0
          %1014 = vmatprep.subr.mxu0 0.0
          %1015 = vmatpush1.msra.mxu0 0.0
          %1016 = vmatprep.subr.mxu0 0.0
          %1017 = vmatpush1.msra.mxu0 0.0
          %1018 = vmatprep.subr.mxu0 0.0
          %1019 = vmatpush1.msra.mxu0 0.0
          %1020 = vmatprep.subr.mxu0 0.0
          %1021 = vmatpush1.msra.mxu0 0.0
          %1022 = vmatprep.subr.mxu0 0.0
          %1023 = vmatpush1.msra.mxu0 0.0
          %1024 = vmatprep.subr.mxu0 0.0
          %1025 = vmatpush1.msra.mxu0 0.0
          %1026 = vmatprep.subr.mxu0 0.0
          %1027 = vmatpush1.msra.mxu0 0.0
          %1028 = vmatprep.subr.mxu0 0.0
          %1029 = vmatpush1.msra.mxu0 0.0
          %1030 = vmatprep.subr.mxu0 0.0
          %1031 = vmatpush1.msra.mxu0 0.0
          %1032 = vmatprep.subr.mxu0 0.0
          %1033 = vmatpush1.msra.mxu0 0.0
          %1034 = vmatprep.subr.mxu0 0.0
          %1035 = vmatpush1.msra.mxu0 0.0
          %1036 = vmatprep.subr.mxu0 0.0
          %1037 = vmatpush1.msra.mxu0 0.0
          %1038 = vmatprep.subr.mxu0 0.0
          %1039 = vmatpush1.msra.mxu0 0.0
          %1040 = vmatprep.subr.mxu0 0.0
          %1041 = vmatpush1.msra.mxu0 0.0
          %1042 = vmatprep.subr.mxu0 0.0
          %1043 = vmatpush1.msra.mxu0 0.0
          %1044 = vmatprep.subr.mxu0 0.0
          %1045 = vmatpush1.msra.mxu0 0.0
          %1046 = vmatprep.subr.mxu0 0.0
          %1047 = vmatpush1.msra.mxu0 0.0
          %1048 = vmatprep.subr.mxu0 0.0
          %1049 = vmatpush1.msra.mxu0 0.0
          %1050 = vmatprep.mubr.f32.mxu0 0.0
          %v1051 = vand.u32 %v830, 4294901760
          %v1052 = vsub.f32 %v830, %v1051
          %1053 = vmatmul.mubr.f32.gmra.mrb[0].mxu0 %v1052
          %v1054 = vpop.f32.mrb[0].mxu0
          %v1055 = vadd.f32 %v981, %v1054
          %v1056 = vpop.f32.mrb[0].mxu0
          %1057 = vdwg.mxu0
          %1058 = vmatprep.subr.mxu0 0.0
          %v1059 = vand.u32 %v366, 4294901760
          %1060 = vmatpush1.msra.mxu0 %v1059
          %1061 = vmatprep.subr.mxu0 0.0
          %1062 = vmatpush1.msra.mxu0 0.0
          %1063 = vmatprep.subr.mxu0 0.0
          %1064 = vmatpush1.msra.mxu0 0.0
          %1065 = vmatprep.subr.mxu0 0.0
          %1066 = vmatpush1.msra.mxu0 0.0
          %1067 = vmatprep.subr.mxu0 0.0
          %1068 = vmatpush1.msra.mxu0 0.0
          %1069 = vmatprep.subr.mxu0 0.0
          %1070 = vmatpush1.msra.mxu0 0.0
          %1071 = vmatprep.subr.mxu0 0.0
          %1072 = vmatpush1.msra.mxu0 0.0
          %1073 = vmatprep.subr.mxu0 0.0
          %1074 = vmatpush1.msra.mxu0 0.0
          %1075 = vmatprep.subr.mxu0 0.0
          %1076 = vmatpush1.msra.mxu0 0.0
          %1077 = vmatprep.subr.mxu0 0.0
          %1078 = vmatpush1.msra.mxu0 0.0
          %1079 = vmatprep.subr.mxu0 0.0
          %1080 = vmatpush1.msra.mxu0 0.0
          %1081 = vmatprep.subr.mxu0 0.0
          %1082 = vmatpush1.msra.mxu0 0.0
          %1083 = vmatprep.subr.mxu0 0.0
          %1084 = vmatpush1.msra.mxu0 0.0
          %1085 = vmatprep.subr.mxu0 0.0
          %1086 = vmatpush1.msra.mxu0 0.0
          %1087 = vmatprep.subr.mxu0 0.0
          %1088 = vmatpush1.msra.mxu0 0.0
          %1089 = vmatprep.subr.mxu0 0.0
          %1090 = vmatpush1.msra.mxu0 0.0
          %1091 = vmatprep.subr.mxu0 0.0
          %1092 = vmatpush1.msra.mxu0 0.0
          %1093 = vmatprep.subr.mxu0 0.0
          %1094 = vmatpush1.msra.mxu0 0.0
          %1095 = vmatprep.subr.mxu0 0.0
          %1096 = vmatpush1.msra.mxu0 0.0
          %1097 = vmatprep.subr.mxu0 0.0
          %1098 = vmatpush1.msra.mxu0 0.0
          %1099 = vmatprep.subr.mxu0 0.0
          %1100 = vmatpush1.msra.mxu0 0.0
          %1101 = vmatprep.subr.mxu0 0.0
          %1102 = vmatpush1.msra.mxu0 0.0
          %1103 = vmatprep.subr.mxu0 0.0
          %1104 = vmatpush1.msra.mxu0 0.0
          %1105 = vmatprep.subr.mxu0 0.0
          %1106 = vmatpush1.msra.mxu0 0.0
          %1107 = vmatprep.subr.mxu0 0.0
          %1108 = vmatpush1.msra.mxu0 0.0
          %1109 = vmatprep.subr.mxu0 0.0
          %1110 = vmatpush1.msra.mxu0 0.0
          %1111 = vmatprep.subr.mxu0 0.0
          %1112 = vmatpush1.msra.mxu0 0.0
          %1113 = vmatprep.subr.mxu0 0.0
          %1114 = vmatpush1.msra.mxu0 0.0
          %1115 = vmatprep.subr.mxu0 0.0
          %1116 = vmatpush1.msra.mxu0 0.0
          %1117 = vmatprep.subr.mxu0 0.0
          %1118 = vmatpush1.msra.mxu0 0.0
          %1119 = vmatprep.subr.mxu0 0.0
          %1120 = vmatpush1.msra.mxu0 0.0
          %1121 = vmatprep.subr.mxu0 0.0
          %1122 = vmatpush1.msra.mxu0 0.0
          %1123 = vmatprep.mubr.f32.mxu0 0.0
          %v1124 = vand.u32 %v830, 4294901760
          %v1125 = vsub.f32 %v830, %v1124
          %v1126 = vand.u32 %v1125, 4294901760
          %1127 = vmatmul.mubr.f32.gmra.mrb[0].mxu0 %v1126
          %v1128 = vpop.f32.mrb[0].mxu0
          %v1129 = vadd.f32 %v1055, %v1128
          %v1130 = vpop.f32.mrb[0].mxu0
          %1131 = vdwg.mxu0
          %1132 = vmatprep.subr.mxu0 0.0
          %v1133 = vand.u32 %v366, 4294901760
          %v1134 = vsub.f32 %v366, %v1133
          %v1135 = vand.u32 %v1134, 4294901760
          %1136 = vmatpush1.msra.mxu0 %v1135
          %1137 = vmatprep.subr.mxu0 0.0
          %1138 = vmatpush1.msra.mxu0 0.0
          %1139 = vmatprep.subr.mxu0 0.0
          %1140 = vmatpush1.msra.mxu0 0.0
          %1141 = vmatprep.subr.mxu0 0.0
          %1142 = vmatpush1.msra.mxu0 0.0
          %1143 = vmatprep.subr.mxu0 0.0
          %1144 = vmatpush1.msra.mxu0 0.0
          %1145 = vmatprep.subr.mxu0 0.0
          %1146 = vmatpush1.msra.mxu0 0.0
          %1147 = vmatprep.subr.mxu0 0.0
          %1148 = vmatpush1.msra.mxu0 0.0
          %1149 = vmatprep.subr.mxu0 0.0
          %1150 = vmatpush1.msra.mxu0 0.0
          %1151 = vmatprep.subr.mxu0 0.0
          %1152 = vmatpush1.msra.mxu0 0.0
          %1153 = vmatprep.subr.mxu0 0.0
          %1154 = vmatpush1.msra.mxu0 0.0
          %1155 = vmatprep.subr.mxu0 0.0
          %1156 = vmatpush1.msra.mxu0 0.0
          %1157 = vmatprep.subr.mxu0 0.0
          %1158 = vmatpush1.msra.mxu0 0.0
          %1159 = vmatprep.subr.mxu0 0.0
          %1160 = vmatpush1.msra.mxu0 0.0
          %1161 = vmatprep.subr.mxu0 0.0
          %1162 = vmatpush1.msra.mxu0 0.0
          %1163 = vmatprep.subr.mxu0 0.0
          %1164 = vmatpush1.msra.mxu0 0.0
          %1165 = vmatprep.subr.mxu0 0.0
          %1166 = vmatpush1.msra.mxu0 0.0
          %1167 = vmatprep.subr.mxu0 0.0
          %1168 = vmatpush1.msra.mxu0 0.0
          %1169 = vmatprep.subr.mxu0 0.0
          %1170 = vmatpush1.msra.mxu0 0.0
          %1171 = vmatprep.subr.mxu0 0.0
          %1172 = vmatpush1.msra.mxu0 0.0
          %1173 = vmatprep.subr.mxu0 0.0
          %1174 = vmatpush1.msra.mxu0 0.0
          %1175 = vmatprep.subr.mxu0 0.0
          %1176 = vmatpush1.msra.mxu0 0.0
          %1177 = vmatprep.subr.mxu0 0.0
          %1178 = vmatpush1.msra.mxu0 0.0
          %1179 = vmatprep.subr.mxu0 0.0
          %1180 = vmatpush1.msra.mxu0 0.0
          %1181 = vmatprep.subr.mxu0 0.0
          %1182 = vmatpush1.msra.mxu0 0.0
          %1183 = vmatprep.subr.mxu0 0.0
          %1184 = vmatpush1.msra.mxu0 0.0
          %1185 = vmatprep.subr.mxu0 0.0
          %1186 = vmatpush1.msra.mxu0 0.0
          %1187 = vmatprep.subr.mxu0 0.0
          %1188 = vmatpush1.msra.mxu0 0.0
          %1189 = vmatprep.subr.mxu0 0.0
          %1190 = vmatpush1.msra.mxu0 0.0
          %1191 = vmatprep.subr.mxu0 0.0
          %1192 = vmatpush1.msra.mxu0 0.0
          %1193 = vmatprep.subr.mxu0 0.0
          %1194 = vmatpush1.msra.mxu0 0.0
          %1195 = vmatprep.subr.mxu0 0.0
          %1196 = vmatpush1.msra.mxu0 0.0
          %1197 = vmatprep.subr.mxu0 0.0
          %1198 = vmatpush1.msra.mxu0 0.0
          %1199 = vmatprep.mubr.f32.mxu0 0.0
          %v1200 = vand.u32 %v830, 4294901760
          %1201 = vmatmul.mubr.f32.gmra.mrb[0].mxu0 %v1200
          %v1202 = vpop.f32.mrb[0].mxu0
          %v1203 = vadd.f32 %v1129, %v1202
          %v1204 = vpop.f32.mrb[0].mxu0
          %1205 = vdwg.mxu0
          %1206 = vmatprep.subr.mxu0 0.0
          %v1207 = vand.u32 %v366, 4294901760
          %1208 = vmatpush1.msra.mxu0 %v1207
          %1209 = vmatprep.subr.mxu0 0.0
          %1210 = vmatpush1.msra.mxu0 0.0
          %1211 = vmatprep.subr.mxu0 0.0
          %1212 = vmatpush1.msra.mxu0 0.0
          %1213 = vmatprep.subr.mxu0 0.0
          %1214 = vmatpush1.msra.mxu0 0.0
          %1215 = vmatprep.subr.mxu0 0.0
          %1216 = vmatpush1.msra.mxu0 0.0
          %1217 = vmatprep.subr.mxu0 0.0
          %1218 = vmatpush1.msra.mxu0 0.0
          %1219 = vmatprep.subr.mxu0 0.0
          %1220 = vmatpush1.msra.mxu0 0.0
          %1221 = vmatprep.subr.mxu0 0.0
          %1222 = vmatpush1.msra.mxu0 0.0
          %1223 = vmatprep.subr.mxu0 0.0
          %1224 = vmatpush1.msra.mxu0 0.0
          %1225 = vmatprep.subr.mxu0 0.0
          %1226 = vmatpush1.msra.mxu0 0.0
          %1227 = vmatprep.subr.mxu0 0.0
          %1228 = vmatpush1.msra.mxu0 0.0
          %1229 = vmatprep.subr.mxu0 0.0
          %1230 = vmatpush1.msra.mxu0 0.0
          %1231 = vmatprep.subr.mxu0 0.0
          %1232 = vmatpush1.msra.mxu0 0.0
          %1233 = vmatprep.subr.mxu0 0.0
          %1234 = vmatpush1.msra.mxu0 0.0
          %1235 = vmatprep.subr.mxu0 0.0
          %1236 = vmatpush1.msra.mxu0 0.0
          %1237 = vmatprep.subr.mxu0 0.0
          %1238 = vmatpush1.msra.mxu0 0.0
          %1239 = vmatprep.subr.mxu0 0.0
          %1240 = vmatpush1.msra.mxu0 0.0
          %1241 = vmatprep.subr.mxu0 0.0
          %1242 = vmatpush1.msra.mxu0 0.0
          %1243 = vmatprep.subr.mxu0 0.0
          %1244 = vmatpush1.msra.mxu0 0.0
          %1245 = vmatprep.subr.mxu0 0.0
          %1246 = vmatpush1.msra.mxu0 0.0
          %1247 = vmatprep.subr.mxu0 0.0
          %1248 = vmatpush1.msra.mxu0 0.0
          %1249 = vmatprep.subr.mxu0 0.0
          %1250 = vmatpush1.msra.mxu0 0.0
          %1251 = vmatprep.subr.mxu0 0.0
          %1252 = vmatpush1.msra.mxu0 0.0
          %1253 = vmatprep.subr.mxu0 0.0
          %1254 = vmatpush1.msra.mxu0 0.0
          %1255 = vmatprep.subr.mxu0 0.0
          %1256 = vmatpush1.msra.mxu0 0.0
          %1257 = vmatprep.subr.mxu0 0.0
          %1258 = vmatpush1.msra.mxu0 0.0
          %1259 = vmatprep.subr.mxu0 0.0
          %1260 = vmatpush1.msra.mxu0 0.0
          %1261 = vmatprep.subr.mxu0 0.0
          %1262 = vmatpush1.msra.mxu0 0.0
          %1263 = vmatprep.subr.mxu0 0.0
          %1264 = vmatpush1.msra.mxu0 0.0
          %1265 = vmatprep.subr.mxu0 0.0
          %1266 = vmatpush1.msra.mxu0 0.0
          %1267 = vmatprep.subr.mxu0 0.0
          %1268 = vmatpush1.msra.mxu0 0.0
          %1269 = vmatprep.subr.mxu0 0.0
          %1270 = vmatpush1.msra.mxu0 0.0
          %1271 = vmatprep.mubr.f32.mxu0 0.0
          %v1272 = vand.u32 %v830, 4294901760
          %1273 = vmatmul.mubr.f32.gmra.mrb[0].mxu0 %v1272
          %v1274 = vpop.f32.mrb[0].mxu0
          %v1275 = vadd.f32 %v1203, %v1274
          %v1276 = vpop.f32.mrb[0].mxu0
          %1277 = vdwg.mxu0
          %v1278 = vrcp.pop %v828
          %v1279 = vmul.f32 %v1275, %v1278
          %v1280 = vld [vmem:[#allocation2] sm:$0xff]
          %s1281 = scalar_lea.vmem [#allocation9], %s360
          %v1282 = vld [vmem:[%s1281] sm:$0xff]
          %v1284 = vsel %vm367, %v1279, 0
          %1286 = vmatprep.subr.mxu0 0.0
          %v1287 = vand.u32 %v1282, 4294901760
          %1288 = vmatpush1.msra.mxu0 %v1287
          %1289 = vmatprep.subr.mxu0 0.0
          %1290 = vmatpush1.msra.mxu0 0.0
          %1291 = vmatprep.subr.mxu0 0.0
          %1292 = vmatpush1.msra.mxu0 0.0
          %1293 = vmatprep.subr.mxu0 0.0
          %1294 = vmatpush1.msra.mxu0 0.0
          %1295 = vmatprep.subr.mxu0 0.0
          %1296 = vmatpush1.msra.mxu0 0.0
          %1297 = vmatprep.subr.mxu0 0.0
          %1298 = vmatpush1.msra.mxu0 0.0
          %1299 = vmatprep.subr.mxu0 0.0
          %1300 = vmatpush1.msra.mxu0 0.0
          %1301 = vmatprep.subr.mxu0 0.0
          %1302 = vmatpush1.msra.mxu0 0.0
          %1303 = vmatprep.subr.mxu0 0.0
          %1304 = vmatpush1.msra.mxu0 0.0
          %1305 = vmatprep.subr.mxu0 0.0
          %1306 = vmatpush1.msra.mxu0 0.0
          %1307 = vmatprep.subr.mxu0 0.0
          %1308 = vmatpush1.msra.mxu0 0.0
          %1309 = vmatprep.subr.mxu0 0.0
          %1310 = vmatpush1.msra.mxu0 0.0
          %1311 = vmatprep.subr.mxu0 0.0
          %1312 = vmatpush1.msra.mxu0 0.0
          %1313 = vmatprep.subr.mxu0 0.0
          %1314 = vmatpush1.msra.mxu0 0.0
          %1315 = vmatprep.subr.mxu0 0.0
          %1316 = vmatpush1.msra.mxu0 0.0
          %1317 = vmatprep.subr.mxu0 0.0
          %1318 = vmatpush1.msra.mxu0 0.0
          %1319 = vmatprep.subr.mxu0 0.0
          %1320 = vmatpush1.msra.mxu0 0.0
          %1321 = vmatprep.subr.mxu0 0.0
          %1322 = vmatpush1.msra.mxu0 0.0
          %1323 = vmatprep.subr.mxu0 0.0
          %1324 = vmatpush1.msra.mxu0 0.0
          %1325 = vmatprep.subr.mxu0 0.0
          %1326 = vmatpush1.msra.mxu0 0.0
          %1327 = vmatprep.subr.mxu0 0.0
          %1328 = vmatpush1.msra.mxu0 0.0
          %1329 = vmatprep.subr.mxu0 0.0
          %1330 = vmatpush1.msra.mxu0 0.0
          %1331 = vmatprep.subr.mxu0 0.0
          %1332 = vmatpush1.msra.mxu0 0.0
          %1333 = vmatprep.subr.mxu0 0.0
          %1334 = vmatpush1.msra.mxu0 0.0
          %1335 = vmatprep.subr.mxu0 0.0
          %1336 = vmatpush1.msra.mxu0 0.0
          %1337 = vmatprep.subr.mxu0 0.0
          %1338 = vmatpush1.msra.mxu0 0.0
          %1339 = vmatprep.subr.mxu0 0.0
          %1340 = vmatpush1.msra.mxu0 0.0
          %1341 = vmatprep.subr.mxu0 0.0
          %1342 = vmatpush1.msra.mxu0 0.0
          %1343 = vmatprep.subr.mxu0 0.0
          %1344 = vmatpush1.msra.mxu0 0.0
          %1345 = vmatprep.subr.mxu0 0.0
          %1346 = vmatpush1.msra.mxu0 0.0
          %1347 = vmatprep.subr.mxu0 0.0
          %1348 = vmatpush1.msra.mxu0 0.0
          %1349 = vmatprep.subr.mxu0 0.0
          %1350 = vmatpush1.msra.mxu0 0.0
          %1351 = vmatprep.mubr.f32.mxu0 0.0
          %v1352 = vand.u32 %v1284, 4294901760
          %v1353 = vsub.f32 %v1284, %v1352
          %v1354 = vand.u32 %v1353, 4294901760
          %v1355 = vsub.f32 %v1353, %v1354
          %v1356 = vand.u32 %v1355, 4294901760
          %1357 = vmatmul.mubr.f32.gmra.mrb[0].mxu0 %v1356
          %v1358 = vpop.f32.mrb[0].mxu0
          %v1359 = vadd.f32 0.0, %v1358
          %v1360 = vpop.f32.mrb[0].mxu0
          %1361 = vdwg.mxu0
          %1362 = vmatprep.subr.mxu0 0.0
          %v1363 = vand.u32 %v1282, 4294901760
          %v1364 = vsub.f32 %v1282, %v1363
          %v1365 = vand.u32 %v1364, 4294901760
          %v1366 = vsub.f32 %v1364, %v1365
          %v1367 = vand.u32 %v1366, 4294901760
          %1368 = vmatpush1.msra.mxu0 %v1367
          %1369 = vmatprep.subr.mxu0 0.0
          %1370 = vmatpush1.msra.mxu0 0.0
          %1371 = vmatprep.subr.mxu0 0.0
          %1372 = vmatpush1.msra.mxu0 0.0
          %1373 = vmatprep.subr.mxu0 0.0
          %1374 = vmatpush1.msra.mxu0 0.0
          %1375 = vmatprep.subr.mxu0 0.0
          %1376 = vmatpush1.msra.mxu0 0.0
          %1377 = vmatprep.subr.mxu0 0.0
          %1378 = vmatpush1.msra.mxu0 0.0
          %1379 = vmatprep.subr.mxu0 0.0
          %1380 = vmatpush1.msra.mxu0 0.0
          %1381 = vmatprep.subr.mxu0 0.0
          %1382 = vmatpush1.msra.mxu0 0.0
          %1383 = vmatprep.subr.mxu0 0.0
          %1384 = vmatpush1.msra.mxu0 0.0
          %1385 = vmatprep.subr.mxu0 0.0
          %1386 = vmatpush1.msra.mxu0 0.0
          %1387 = vmatprep.subr.mxu0 0.0
          %1388 = vmatpush1.msra.mxu0 0.0
          %1389 = vmatprep.subr.mxu0 0.0
          %1390 = vmatpush1.msra.mxu0 0.0
          %1391 = vmatprep.subr.mxu0 0.0
          %1392 = vmatpush1.msra.mxu0 0.0
          %1393 = vmatprep.subr.mxu0 0.0
          %1394 = vmatpush1.msra.mxu0 0.0
          %1395 = vmatprep.subr.mxu0 0.0
          %1396 = vmatpush1.msra.mxu0 0.0
          %1397 = vmatprep.subr.mxu0 0.0
          %1398 = vmatpush1.msra.mxu0 0.0
          %1399 = vmatprep.subr.mxu0 0.0
          %1400 = vmatpush1.msra.mxu0 0.0
          %1401 = vmatprep.subr.mxu0 0.0
          %1402 = vmatpush1.msra.mxu0 0.0
          %1403 = vmatprep.subr.mxu0 0.0
          %1404 = vmatpush1.msra.mxu0 0.0
          %1405 = vmatprep.subr.mxu0 0.0
          %1406 = vmatpush1.msra.mxu0 0.0
          %1407 = vmatprep.subr.mxu0 0.0
          %1408 = vmatpush1.msra.mxu0 0.0
          %1409 = vmatprep.subr.mxu0 0.0
          %1410 = vmatpush1.msra.mxu0 0.0
          %1411 = vmatprep.subr.mxu0 0.0
          %1412 = vmatpush1.msra.mxu0 0.0
          %1413 = vmatprep.subr.mxu0 0.0
          %1414 = vmatpush1.msra.mxu0 0.0
          %1415 = vmatprep.subr.mxu0 0.0
          %1416 = vmatpush1.msra.mxu0 0.0
          %1417 = vmatprep.subr.mxu0 0.0
          %1418 = vmatpush1.msra.mxu0 0.0
          %1419 = vmatprep.subr.mxu0 0.0
          %1420 = vmatpush1.msra.mxu0 0.0
          %1421 = vmatprep.subr.mxu0 0.0
          %1422 = vmatpush1.msra.mxu0 0.0
          %1423 = vmatprep.subr.mxu0 0.0
          %1424 = vmatpush1.msra.mxu0 0.0
          %1425 = vmatprep.subr.mxu0 0.0
          %1426 = vmatpush1.msra.mxu0 0.0
          %1427 = vmatprep.subr.mxu0 0.0
          %1428 = vmatpush1.msra.mxu0 0.0
          %1429 = vmatprep.subr.mxu0 0.0
          %1430 = vmatpush1.msra.mxu0 0.0
          %1431 = vmatprep.mubr.f32.mxu0 0.0
          %v1432 = vand.u32 %v1284, 4294901760
          %1433 = vmatmul.mubr.f32.gmra.mrb[0].mxu0 %v1432
          %v1434 = vpop.f32.mrb[0].mxu0
          %v1435 = vadd.f32 %v1359, %v1434
          %v1436 = vpop.f32.mrb[0].mxu0
          %1437 = vdwg.mxu0
          %1438 = vmatprep.subr.mxu0 0.0
          %v1439 = vand.u32 %v1282, 4294901760
          %v1440 = vsub.f32 %v1282, %v1439
          %1441 = vmatpush1.msra.mxu0 %v1440
          %1442 = vmatprep.subr.mxu0 0.0
          %1443 = vmatpush1.msra.mxu0 0.0
          %1444 = vmatprep.subr.mxu0 0.0
          %1445 = vmatpush1.msra.mxu0 0.0
          %1446 = vmatprep.subr.mxu0 0.0
          %1447 = vmatpush1.msra.mxu0 0.0
          %1448 = vmatprep.subr.mxu0 0.0
          %1449 = vmatpush1.msra.mxu0 0.0
          %1450 = vmatprep.subr.mxu0 0.0
          %1451 = vmatpush1.msra.mxu0 0.0
          %1452 = vmatprep.subr.mxu0 0.0
          %1453 = vmatpush1.msra.mxu0 0.0
          %1454 = vmatprep.subr.mxu0 0.0
          %1455 = vmatpush1.msra.mxu0 0.0
          %1456 = vmatprep.subr.mxu0 0.0
          %1457 = vmatpush1.msra.mxu0 0.0
          %1458 = vmatprep.subr.mxu0 0.0
          %1459 = vmatpush1.msra.mxu0 0.0
          %1460 = vmatprep.subr.mxu0 0.0
          %1461 = vmatpush1.msra.mxu0 0.0
          %1462 = vmatprep.subr.mxu0 0.0
          %1463 = vmatpush1.msra.mxu0 0.0
          %1464 = vmatprep.subr.mxu0 0.0
          %1465 = vmatpush1.msra.mxu0 0.0
          %1466 = vmatprep.subr.mxu0 0.0
          %1467 = vmatpush1.msra.mxu0 0.0
          %1468 = vmatprep.subr.mxu0 0.0
          %1469 = vmatpush1.msra.mxu0 0.0
          %1470 = vmatprep.subr.mxu0 0.0
          %1471 = vmatpush1.msra.mxu0 0.0
          %1472 = vmatprep.subr.mxu0 0.0
          %1473 = vmatpush1.msra.mxu0 0.0
          %1474 = vmatprep.subr.mxu0 0.0
          %1475 = vmatpush1.msra.mxu0 0.0
          %1476 = vmatprep.subr.mxu0 0.0
          %1477 = vmatpush1.msra.mxu0 0.0
          %1478 = vmatprep.subr.mxu0 0.0
          %1479 = vmatpush1.msra.mxu0 0.0
          %1480 = vmatprep.subr.mxu0 0.0
          %1481 = vmatpush1.msra.mxu0 0.0
          %1482 = vmatprep.subr.mxu0 0.0
          %1483 = vmatpush1.msra.mxu0 0.0
          %1484 = vmatprep.subr.mxu0 0.0
          %1485 = vmatpush1.msra.mxu0 0.0
          %1486 = vmatprep.subr.mxu0 0.0
          %1487 = vmatpush1.msra.mxu0 0.0
          %1488 = vmatprep.subr.mxu0 0.0
          %1489 = vmatpush1.msra.mxu0 0.0
          %1490 = vmatprep.subr.mxu0 0.0
          %1491 = vmatpush1.msra.mxu0 0.0
          %1492 = vmatprep.subr.mxu0 0.0
          %1493 = vmatpush1.msra.mxu0 0.0
          %1494 = vmatprep.subr.mxu0 0.0
          %1495 = vmatpush1.msra.mxu0 0.0
          %1496 = vmatprep.subr.mxu0 0.0
          %1497 = vmatpush1.msra.mxu0 0.0
          %1498 = vmatprep.subr.mxu0 0.0
          %1499 = vmatpush1.msra.mxu0 0.0
          %1500 = vmatprep.subr.mxu0 0.0
          %1501 = vmatpush1.msra.mxu0 0.0
          %1502 = vmatprep.subr.mxu0 0.0
          %1503 = vmatpush1.msra.mxu0 0.0
          %1504 = vmatprep.mubr.f32.mxu0 0.0
          %v1505 = vand.u32 %v1284, 4294901760
          %v1506 = vsub.f32 %v1284, %v1505
          %1507 = vmatmul.mubr.f32.gmra.mrb[0].mxu0 %v1506
          %v1508 = vpop.f32.mrb[0].mxu0
          %v1509 = vadd.f32 %v1435, %v1508
          %v1510 = vpop.f32.mrb[0].mxu0
          %1511 = vdwg.mxu0
          %1512 = vmatprep.subr.mxu0 0.0
          %v1513 = vand.u32 %v1282, 4294901760
          %1514 = vmatpush1.msra.mxu0 %v1513
          %1515 = vmatprep.subr.mxu0 0.0
          %1516 = vmatpush1.msra.mxu0 0.0
          %1517 = vmatprep.subr.mxu0 0.0
          %1518 = vmatpush1.msra.mxu0 0.0
          %1519 = vmatprep.subr.mxu0 0.0
          %1520 = vmatpush1.msra.mxu0 0.0
          %1521 = vmatprep.subr.mxu0 0.0
          %1522 = vmatpush1.msra.mxu0 0.0
          %1523 = vmatprep.subr.mxu0 0.0
          %1524 = vmatpush1.msra.mxu0 0.0
          %1525 = vmatprep.subr.mxu0 0.0
          %1526 = vmatpush1.msra.mxu0 0.0
          %1527 = vmatprep.subr.mxu0 0.0
          %1528 = vmatpush1.msra.mxu0 0.0
          %1529 = vmatprep.subr.mxu0 0.0
          %1530 = vmatpush1.msra.mxu0 0.0
          %1531 = vmatprep.subr.mxu0 0.0
          %1532 = vmatpush1.msra.mxu0 0.0
          %1533 = vmatprep.subr.mxu0 0.0
          %1534 = vmatpush1.msra.mxu0 0.0
          %1535 = vmatprep.subr.mxu0 0.0
          %1536 = vmatpush1.msra.mxu0 0.0
          %1537 = vmatprep.subr.mxu0 0.0
          %1538 = vmatpush1.msra.mxu0 0.0
          %1539 = vmatprep.subr.mxu0 0.0
          %1540 = vmatpush1.msra.mxu0 0.0
          %1541 = vmatprep.subr.mxu0 0.0
          %1542 = vmatpush1.msra.mxu0 0.0
          %1543 = vmatprep.subr.mxu0 0.0
          %1544 = vmatpush1.msra.mxu0 0.0
          %1545 = vmatprep.subr.mxu0 0.0
          %1546 = vmatpush1.msra.mxu0 0.0
          %1547 = vmatprep.subr.mxu0 0.0
          %1548 = vmatpush1.msra.mxu0 0.0
          %1549 = vmatprep.subr.mxu0 0.0
          %1550 = vmatpush1.msra.mxu0 0.0
          %1551 = vmatprep.subr.mxu0 0.0
          %1552 = vmatpush1.msra.mxu0 0.0
          %1553 = vmatprep.subr.mxu0 0.0
          %1554 = vmatpush1.msra.mxu0 0.0
          %1555 = vmatprep.subr.mxu0 0.0
          %1556 = vmatpush1.msra.mxu0 0.0
          %1557 = vmatprep.subr.mxu0 0.0
          %1558 = vmatpush1.msra.mxu0 0.0
          %1559 = vmatprep.subr.mxu0 0.0
          %1560 = vmatpush1.msra.mxu0 0.0
          %1561 = vmatprep.subr.mxu0 0.0
          %1562 = vmatpush1.msra.mxu0 0.0
          %1563 = vmatprep.subr.mxu0 0.0
          %1564 = vmatpush1.msra.mxu0 0.0
          %1565 = vmatprep.subr.mxu0 0.0
          %1566 = vmatpush1.msra.mxu0 0.0
          %1567 = vmatprep.subr.mxu0 0.0
          %1568 = vmatpush1.msra.mxu0 0.0
          %1569 = vmatprep.subr.mxu0 0.0
          %1570 = vmatpush1.msra.mxu0 0.0
          %1571 = vmatprep.subr.mxu0 0.0
          %1572 = vmatpush1.msra.mxu0 0.0
          %1573 = vmatprep.subr.mxu0 0.0
          %1574 = vmatpush1.msra.mxu0 0.0
          %1575 = vmatprep.subr.mxu0 0.0
          %1576 = vmatpush1.msra.mxu0 0.0
          %1577 = vmatprep.mubr.f32.mxu0 0.0
          %v1578 = vand.u32 %v1284, 4294901760
          %v1579 = vsub.f32 %v1284, %v1578
          %v1580 = vand.u32 %v1579, 4294901760
          %1581 = vmatmul.mubr.f32.gmra.mrb[0].mxu0 %v1580
          %v1582 = vpop.f32.mrb[0].mxu0
          %v1583 = vadd.f32 %v1509, %v1582
          %v1584 = vpop.f32.mrb[0].mxu0
          %1585 = vdwg.mxu0
          %1586 = vmatprep.subr.mxu0 0.0
          %v1587 = vand.u32 %v1282, 4294901760
          %v1588 = vsub.f32 %v1282, %v1587
          %v1589 = vand.u32 %v1588, 4294901760
          %1590 = vmatpush1.msra.mxu0 %v1589
          %1591 = vmatprep.subr.mxu0 0.0
          %1592 = vmatpush1.msra.mxu0 0.0
          %1593 = vmatprep.subr.mxu0 0.0
          %1594 = vmatpush1.msra.mxu0 0.0
          %1595 = vmatprep.subr.mxu0 0.0
          %1596 = vmatpush1.msra.mxu0 0.0
          %1597 = vmatprep.subr.mxu0 0.0
          %1598 = vmatpush1.msra.mxu0 0.0
          %1599 = vmatprep.subr.mxu0 0.0
          %1600 = vmatpush1.msra.mxu0 0.0
          %1601 = vmatprep.subr.mxu0 0.0
          %1602 = vmatpush1.msra.mxu0 0.0
          %1603 = vmatprep.subr.mxu0 0.0
          %1604 = vmatpush1.msra.mxu0 0.0
          %1605 = vmatprep.subr.mxu0 0.0
          %1606 = vmatpush1.msra.mxu0 0.0
          %1607 = vmatprep.subr.mxu0 0.0
          %1608 = vmatpush1.msra.mxu0 0.0
          %1609 = vmatprep.subr.mxu0 0.0
          %1610 = vmatpush1.msra.mxu0 0.0
          %1611 = vmatprep.subr.mxu0 0.0
          %1612 = vmatpush1.msra.mxu0 0.0
          %1613 = vmatprep.subr.mxu0 0.0
          %1614 = vmatpush1.msra.mxu0 0.0
          %1615 = vmatprep.subr.mxu0 0.0
          %1616 = vmatpush1.msra.mxu0 0.0
          %1617 = vmatprep.subr.mxu0 0.0
          %1618 = vmatpush1.msra.mxu0 0.0
          %1619 = vmatprep.subr.mxu0 0.0
          %1620 = vmatpush1.msra.mxu0 0.0
          %1621 = vmatprep.subr.mxu0 0.0
          %1622 = vmatpush1.msra.mxu0 0.0
          %1623 = vmatprep.subr.mxu0 0.0
          %1624 = vmatpush1.msra.mxu0 0.0
          %1625 = vmatprep.subr.mxu0 0.0
          %1626 = vmatpush1.msra.mxu0 0.0
          %1627 = vmatprep.subr.mxu0 0.0
          %1628 = vmatpush1.msra.mxu0 0.0
          %1629 = vmatprep.subr.mxu0 0.0
          %1630 = vmatpush1.msra.mxu0 0.0
          %1631 = vmatprep.subr.mxu0 0.0
          %1632 = vmatpush1.msra.mxu0 0.0
          %1633 = vmatprep.subr.mxu0 0.0
          %1634 = vmatpush1.msra.mxu0 0.0
          %1635 = vmatprep.subr.mxu0 0.0
          %1636 = vmatpush1.msra.mxu0 0.0
          %1637 = vmatprep.subr.mxu0 0.0
          %1638 = vmatpush1.msra.mxu0 0.0
          %1639 = vmatprep.subr.mxu0 0.0
          %1640 = vmatpush1.msra.mxu0 0.0
          %1641 = vmatprep.subr.mxu0 0.0
          %1642 = vmatpush1.msra.mxu0 0.0
          %1643 = vmatprep.subr.mxu0 0.0
          %1644 = vmatpush1.msra.mxu0 0.0
          %1645 = vmatprep.subr.mxu0 0.0
          %1646 = vmatpush1.msra.mxu0 0.0
          %1647 = vmatprep.subr.mxu0 0.0
          %1648 = vmatpush1.msra.mxu0 0.0
          %1649 = vmatprep.subr.mxu0 0.0
          %1650 = vmatpush1.msra.mxu0 0.0
          %1651 = vmatprep.subr.mxu0 0.0
          %1652 = vmatpush1.msra.mxu0 0.0
          %1653 = vmatprep.mubr.f32.mxu0 0.0
          %v1654 = vand.u32 %v1284, 4294901760
          %1655 = vmatmul.mubr.f32.gmra.mrb[0].mxu0 %v1654
          %v1656 = vpop.f32.mrb[0].mxu0
          %v1657 = vadd.f32 %v1583, %v1656
          %v1658 = vpop.f32.mrb[0].mxu0
          %1659 = vdwg.mxu0
          %1660 = vmatprep.subr.mxu0 0.0
          %v1661 = vand.u32 %v1282, 4294901760
          %1662 = vmatpush1.msra.mxu0 %v1661
          %1663 = vmatprep.subr.mxu0 0.0
          %1664 = vmatpush1.msra.mxu0 0.0
          %1665 = vmatprep.subr.mxu0 0.0
          %1666 = vmatpush1.msra.mxu0 0.0
          %1667 = vmatprep.subr.mxu0 0.0
          %1668 = vmatpush1.msra.mxu0 0.0
          %1669 = vmatprep.subr.mxu0 0.0
          %1670 = vmatpush1.msra.mxu0 0.0
          %1671 = vmatprep.subr.mxu0 0.0
          %1672 = vmatpush1.msra.mxu0 0.0
          %1673 = vmatprep.subr.mxu0 0.0
          %1674 = vmatpush1.msra.mxu0 0.0
          %1675 = vmatprep.subr.mxu0 0.0
          %1676 = vmatpush1.msra.mxu0 0.0
          %1677 = vmatprep.subr.mxu0 0.0
          %1678 = vmatpush1.msra.mxu0 0.0
          %1679 = vmatprep.subr.mxu0 0.0
          %1680 = vmatpush1.msra.mxu0 0.0
          %1681 = vmatprep.subr.mxu0 0.0
          %1682 = vmatpush1.msra.mxu0 0.0
          %1683 = vmatprep.subr.mxu0 0.0
          %1684 = vmatpush1.msra.mxu0 0.0
          %1685 = vmatprep.subr.mxu0 0.0
          %1686 = vmatpush1.msra.mxu0 0.0
          %1687 = vmatprep.subr.mxu0 0.0
          %1688 = vmatpush1.msra.mxu0 0.0
          %1689 = vmatprep.subr.mxu0 0.0
          %1690 = vmatpush1.msra.mxu0 0.0
          %1691 = vmatprep.subr.mxu0 0.0
          %1692 = vmatpush1.msra.mxu0 0.0
          %1693 = vmatprep.subr.mxu0 0.0
          %1694 = vmatpush1.msra.mxu0 0.0
          %1695 = vmatprep.subr.mxu0 0.0
          %1696 = vmatpush1.msra.mxu0 0.0
          %1697 = vmatprep.subr.mxu0 0.0
          %1698 = vmatpush1.msra.mxu0 0.0
          %1699 = vmatprep.subr.mxu0 0.0
          %1700 = vmatpush1.msra.mxu0 0.0
          %1701 = vmatprep.subr.mxu0 0.0
          %1702 = vmatpush1.msra.mxu0 0.0
          %1703 = vmatprep.subr.mxu0 0.0
          %1704 = vmatpush1.msra.mxu0 0.0
          %1705 = vmatprep.subr.mxu0 0.0
          %1706 = vmatpush1.msra.mxu0 0.0
          %1707 = vmatprep.subr.mxu0 0.0
          %1708 = vmatpush1.msra.mxu0 0.0
          %1709 = vmatprep.subr.mxu0 0.0
          %1710 = vmatpush1.msra.mxu0 0.0
          %1711 = vmatprep.subr.mxu0 0.0
          %1712 = vmatpush1.msra.mxu0 0.0
          %1713 = vmatprep.subr.mxu0 0.0
          %1714 = vmatpush1.msra.mxu0 0.0
          %1715 = vmatprep.subr.mxu0 0.0
          %1716 = vmatpush1.msra.mxu0 0.0
          %1717 = vmatprep.subr.mxu0 0.0
          %1718 = vmatpush1.msra.mxu0 0.0
          %1719 = vmatprep.subr.mxu0 0.0
          %1720 = vmatpush1.msra.mxu0 0.0
          %1721 = vmatprep.subr.mxu0 0.0
          %1722 = vmatpush1.msra.mxu0 0.0
          %1723 = vmatprep.subr.mxu0 0.0
          %1724 = vmatpush1.msra.mxu0 0.0
          %1725 = vmatprep.mubr.f32.mxu0 0.0
          %v1726 = vand.u32 %v1284, 4294901760
          %1727 = vmatmul.mubr.f32.gmra.mrb[0].mxu0 %v1726
          %v1728 = vpop.f32.mrb[0].mxu0
          %v1729 = vadd.f32 %v1657, %v1728
          %v1730 = vpop.f32.mrb[0].mxu0
          %1731 = vdwg.mxu0
          %v1732 = vadd.f32 %v1280, %v1729
          %1733 = vst.msk [vmem:[#allocation2] sm:$0xff] %vm352, %v1732
        $region61: #{tpu_custom_call.1} parent=39 // loop_footer
          %s359 = sadd.s32 1, %s355
        $region62: #{tpu_custom_call.1} parent=39 // loop_footer_branch
          %354 = sbr.rel target = $region58
        $region63: #{tpu_custom_call.1} parent=39 // loop_exit
          _
        %v1734 = vld [vmem:[#allocation2] sm:$0xff]
        %v1735 = vld [vmem:[%s4] sm:$0x1]
        %v1737 = vlaneseq
        %v1738 = vshrl.u32 %v1737, 7
        %v1739 = vsub.s32 0, %v1738
        %v1740 = vrot.slane %v1735, %v1739
        %v1742 = vadd.f32 %v1734, %v1740
        %1743 = vst.msk [vmem:[%s351] sm:$0xff] %vm352, %v1742
        %s1744 = sand.u32 %s170, 1
        %s1745 = scalar_lea.sflag [#allocation5], %s1744
        %s1746 = sand.u32 %s170, 1
        %s1747 = smul.addr %s1746, 8
        %s1748 = scalar_lea.vmem [#allocation11], %s1747
        // Predicated region
        $region64: #{tpu_custom_call.1} parent=39 // pred_check
          %p1749 = pneg %p180
        $region65: #{tpu_custom_call.1} parent=39 // pred_check_branch
          %1751 = sbr.rel (%p1749) target = $region67
        $region66: #{tpu_custom_call.1} parent=39 // pred_region
          %s1753 = ssub.s32 128, 128
          %1754 = vsyncadd %s1745, %s1753
          %s1755 = sadd.s32 %s31, %s30
          %s1756 = smul.addr %s1755, 128
          %s1757 = scalar_lea.hbm %s5, %s1756
          %s1759 = sshll.u32 %s1748, 4
          %s1760 = int_to_ptr.vmem [resolvable:$true] %s1759
          %1762 = dma.vmem_to_hbm [thread:$0]  %s1760, 128, %s1757, %s1745
        $region67: #{tpu_custom_call.1} parent=39 // pred_fallthru
          _
      $region40: #{tpu_custom_call.1} parent=5 // pred_fallthru
        _
      %p1763 = scmp.le.s32.totalorder 2, %s21
      // Predicated region
      $region68: #{tpu_custom_call.1} parent=5 // pred_check
        %p1764 = pneg %p1763
      $region69: #{tpu_custom_call.1} parent=5 // pred_check_branch
        %1766 = sbr.rel (%p1764) target = $region71
      $region70: #{tpu_custom_call.1} parent=5 // pred_region
        %s1767 = ssub.s32 %s21, 2
        // Predicated region
        $region72: #{tpu_custom_call.1} parent=70 // pred_check
          %p1768 = pneg %p186
        $region73: #{tpu_custom_call.1} parent=70 // pred_check_branch
          %1770 = sbr.rel (%p1768) target = $region75
        $region74: #{tpu_custom_call.1} parent=70 // pred_region
          %s1771 = sand.u32 %s171, 1
          %s1772 = scalar_lea.sflag [#allocation5], %s1771
          %s1773 = sand.u32 %s171, 1
          %s1774 = smul.addr %s1773, 8
          %s1775 = scalar_lea.vmem [#allocation11], %s1774
          %1776 = dma.done %s1772, 128
        $region75: #{tpu_custom_call.1} parent=70 // pred_fallthru
          _
      $region71: #{tpu_custom_call.1} parent=5 // pred_fallthru
        _
    $region6: #{tpu_custom_call.1} parent=1 // loop_footer
      %s25 = sadd.s32 1, %s21
    $region7: #{tpu_custom_call.1} parent=1 // loop_footer_branch
      %20 = sbr.rel target = $region3
    $region8: #{tpu_custom_call.1} parent=1 // loop_exit
      _
    %1777 = vsyncpa [#allocation4], 1
    %s1778 = scalar_lea.sflag [#allocation4], 1
    %1779 = vsyncpa %s1778, 1
    %1780 = vsyncpa [#allocation7], 1
    %s1781 = scalar_lea.sflag [#allocation7], 1
    %1782 = vsyncpa %s1781, 1
    %1783 = vsyncpa [#allocation10], 1
    %1784 = vsyncpa [#allocation5], 1
    %s1785 = scalar_lea.sflag [#allocation5], 1
    %1786 = vsyncpa %s1785, 1

</llo_original>
